<compile_context>
chip_gen: v7x
topology: tpu7x:2x2x1
jax: 0.10.0
libtpu: 0.0.40
codegen_flags: <defaults>
</compile_context>

<pallas_src>
import jax
import jax.numpy as jnp
from jax.experimental import pallas as pl
from jax.experimental.pallas import tpu as pltpu

NEG_SLOPE = 0.01   # F.leaky_relu default
LANE = 128
TM = 256           # node-row tile
TK = 256           # adjacency K tile (reduction)


def _leaky_relu(x):
    return jnp.where(x > 0, x, NEG_SLOPE * x)


def _round_up(v, m):
    return (v + m - 1) // m * m


def _pad2(w, rows, cols, dtype):
    out = jnp.zeros((rows, cols), dtype)
    return out.at[: w.shape[0], : w.shape[1]].set(w.astype(dtype))


# --------------------------------------------------------------------------
# Kernel 1: ClusterGCNConv(F_in, 256) + leaky_relu
#   grid = (rows, k);  acc <- sum_k A[i,k] @ x[k]   (f32 accumulator)
#   on last k:  h[i] = leaky_relu([acc, x[i]] @ [W_out; W_root] + b)
# --------------------------------------------------------------------------
def conv1_kernel(a_ref, xk_ref, xi_ref, w1_ref, b1_ref, h_ref, acc_ref):
    k = pl.program_id(1)

    @pl.when(k == 0)
    def _():
        acc_ref[...] = jnp.zeros_like(acc_ref)

    acc_ref[...] += jnp.dot(
        a_ref[...], xk_ref[...].astype(jnp.bfloat16),
        preferred_element_type=jnp.float32)

    @pl.when(k == pl.num_programs(1) - 1)
    def _():
        feats = jnp.concatenate(
            [acc_ref[...].astype(jnp.bfloat16),
             xi_ref[...].astype(jnp.bfloat16)], axis=1)
        h = jnp.dot(feats, w1_ref[...],
                    preferred_element_type=jnp.float32) + b1_ref[...]
        h_ref[...] = _leaky_relu(h)


# --------------------------------------------------------------------------
# Kernel 2: ClusterGCNConv(256, 128) + leaky_relu + 3 Linear layers
# --------------------------------------------------------------------------
def conv2_mlp_kernel(a_ref, hk_ref, hi_ref,
                     w2_ref, b2_ref, w3_ref, b3_ref,
                     w4_ref, b4_ref, w5_ref, b5_ref,
                     out_ref, acc_ref):
    k = pl.program_id(1)

    @pl.when(k == 0)
    def _():
        acc_ref[...] = jnp.zeros_like(acc_ref)

    acc_ref[...] += jnp.dot(
        a_ref[...], hk_ref[...].astype(jnp.bfloat16),
        preferred_element_type=jnp.float32)

    @pl.when(k == pl.num_programs(1) - 1)
    def _():
        feats = jnp.concatenate(
            [acc_ref[...].astype(jnp.bfloat16),
             hi_ref[...].astype(jnp.bfloat16)], axis=1)
        h2 = _leaky_relu(
            jnp.dot(feats, w2_ref[...],
                    preferred_element_type=jnp.float32) + b2_ref[...])
        h3 = _leaky_relu(
            jnp.dot(h2.astype(jnp.bfloat16), w3_ref[...],
                    preferred_element_type=jnp.float32) + b3_ref[...])
        h4 = _leaky_relu(
            jnp.dot(h3.astype(jnp.bfloat16), w4_ref[...],
                    preferred_element_type=jnp.float32) + b4_ref[...])
        out_ref[...] = (
            jnp.dot(h4.astype(jnp.bfloat16), w5_ref[...],
                    preferred_element_type=jnp.float32) + b5_ref[...])


# --------------------------------------------------------------------------
# Wrapper
# --------------------------------------------------------------------------
def prepare_params(params, num_classes):
    """Pad feature dims to 128 lanes, stack conv projections, cast to bf16."""
    f_in = params["w1_out"].shape[0]
    fp = _round_up(f_in, LANE)
    l1 = params["w3"].shape[1]
    l2 = params["w4"].shape[1]
    l1p, l2p, ncp = (_round_up(d, LANE) for d in (l1, l2, num_classes))

    w1s = jnp.concatenate(
        [_pad2(params["w1_out"], fp, 256, jnp.bfloat16),
         _pad2(params["w1_root"], fp, 256, jnp.bfloat16)], axis=0)     # (2*fp, 256)
    w2s = jnp.concatenate(
        [params["w2_out"].astype(jnp.bfloat16),
         params["w2_root"].astype(jnp.bfloat16)], axis=0)              # (512, 128)
    return {
        "fp": fp, "l1p": l1p, "l2p": l2p, "ncp": ncp, "num_classes": num_classes,
        "w1s": w1s,
        "b1": params["b1"].astype(jnp.float32),
        "w2s": w2s,
        "b2": params["b2"].astype(jnp.float32),
        "w3": _pad2(params["w3"], 128, l1p, jnp.bfloat16),
        "b3": _pad2(params["b3"], 1, l1p, jnp.float32),
        "w4": _pad2(params["w4"], l1p, l2p, jnp.bfloat16),
        "b4": _pad2(params["b4"], 1, l2p, jnp.float32),
        "w5": _pad2(params["w5"], l2p, ncp, jnp.bfloat16),
        "b5": _pad2(params["b5"], 1, ncp, jnp.float32),
    }


def cluster_gcn_dnn_forward(a_norm, x, prep):
    n, f_in = x.shape
    fp, l1p, l2p, ncp = prep["fp"], prep["l1p"], prep["l2p"], prep["ncp"]
    nc = prep["num_classes"]
    n_pad = _round_up(n, max(TM, TK))
    grid = (n_pad // TM, n_pad // TK)

    a_pad = jnp.zeros((n_pad, n_pad), jnp.bfloat16).at[:n, :n].set(
        a_norm.astype(jnp.bfloat16))
    x_pad = jnp.zeros((n_pad, fp), jnp.float32).at[:n, :f_in].set(
        x.astype(jnp.float32))

    cparams = pltpu.CompilerParams(
        dimension_semantics=("parallel", "arbitrary"),
        vmem_limit_bytes=32 * 1024 * 1024)

    # ---- conv1 ----
    flops1 = 2 * n_pad * n_pad * fp + 2 * n_pad * (2 * fp) * 256
    bytes1 = (2 * n_pad * n_pad + 2 * 4 * n_pad * fp + 4 * n_pad * 256
              + 2 * (2 * fp) * 256 + 4 * 256)
    h = pl.pallas_call(
        conv1_kernel,
        out_shape=jax.ShapeDtypeStruct((n_pad, 256), jnp.float32),
        grid_spec=pltpu.PrefetchScalarGridSpec(
            num_scalar_prefetch=0,
            grid=grid,
            in_specs=[
                pl.BlockSpec((TM, TK), lambda i, k: (i, k)),        # A tile
                pl.BlockSpec((TK, fp), lambda i, k: (k, 0)),        # x rows (K)
                pl.BlockSpec((TM, fp), lambda i, k: (i, 0)),        # x rows (root)
                pl.BlockSpec((2 * fp, 256), lambda i, k: (0, 0)),   # [W_out; W_root]
                pl.BlockSpec((1, 256), lambda i, k: (0, 0)),        # bias
            ],
            out_specs=pl.BlockSpec((TM, 256), lambda i, k: (i, 0)),
            scratch_shapes=[pltpu.VMEM((TM, fp), jnp.float32)],
        ),
        compiler_params=cparams,
        cost_estimate=pl.CostEstimate(
            flops=flops1, transcendentals=0, bytes_accessed=bytes1),
    )(a_pad, x_pad, x_pad, prep["w1s"], prep["b1"])

    # ---- conv2 + MLP ----
    flops2 = (2 * n_pad * n_pad * 256 + 2 * n_pad * 512 * 128
              + 2 * n_pad * 128 * l1p + 2 * n_pad * l1p * l2p
              + 2 * n_pad * l2p * ncp)
    bytes2 = (2 * n_pad * n_pad + 2 * 4 * n_pad * 256 + 4 * n_pad * ncp
              + 2 * (512 * 128 + 128 * l1p + l1p * l2p + l2p * ncp))
    out_pad = pl.pallas_call(
        conv2_mlp_kernel,
        out_shape=jax.ShapeDtypeStruct((n_pad, ncp), jnp.float32),
        grid_spec=pltpu.PrefetchScalarGridSpec(
            num_scalar_prefetch=0,
            grid=grid,
            in_specs=[
                pl.BlockSpec((TM, TK), lambda i, k: (i, k)),        # A tile
                pl.BlockSpec((TK, 256), lambda i, k: (k, 0)),       # h rows (K)
                pl.BlockSpec((TM, 256), lambda i, k: (i, 0)),       # h rows (root)
                pl.BlockSpec((512, 128), lambda i, k: (0, 0)),      # [W2_out; W2_root]
                pl.BlockSpec((1, 128), lambda i, k: (0, 0)),        # b2
                pl.BlockSpec((128, l1p), lambda i, k: (0, 0)),      # W3
                pl.BlockSpec((1, l1p), lambda i, k: (0, 0)),        # b3
                pl.BlockSpec((l1p, l2p), lambda i, k: (0, 0)),      # W4
                pl.BlockSpec((1, l2p), lambda i, k: (0, 0)),        # b4
                pl.BlockSpec((l2p, ncp), lambda i, k: (0, 0)),      # W5
                pl.BlockSpec((1, ncp), lambda i, k: (0, 0)),        # b5
            ],
            out_specs=pl.BlockSpec((TM, ncp), lambda i, k: (i, 0)),
            scratch_shapes=[pltpu.VMEM((TM, 256), jnp.float32)],
        ),
        compiler_params=cparams,
        cost_estimate=pl.CostEstimate(
            flops=flops2, transcendentals=0, bytes_accessed=bytes2),
    )(a_pad, h, h, prep["w2s"], prep["b2"], prep["w3"], prep["b3"],
      prep["w4"], prep["b4"], prep["w5"], prep["b5"])

    return out_pad[:n, :nc]


# --------------------------------------------------------------------------
# Graph / parameter construction + bf16-matched pure-JAX reference
# --------------------------------------------------------------------------
def build_norm_adj(edge_index, num_nodes):
    """Dense D^-1 (A + I): row i aggregates from its in-neighbors j."""
    src, tgt = edge_index[0], edge_index[1]
    m = jnp.zeros((num_nodes, num_nodes), jnp.float32)
    m = m.at[tgt, src].add(1.0)                          # M[i, j] = #edges j -> i
    m = m + jnp.eye(num_nodes, dtype=jnp.float32)        # self loops
    deg = jnp.clip(jnp.sum(m, axis=1), 1.0, None)
    return m / deg[:, None]


def init_params(key, num_node_features, num_classes, layer_size1, layer_size2):
    ks = jax.random.split(key, 10)

    def lin(k, fin, fout):
        s = 1.0 / jnp.sqrt(fin)
        return jax.random.uniform(k, (fin, fout), jnp.float32, -s, s)

    return {
        "w1_out": lin(ks[0], num_node_features, 256),
        "w1_root": lin(ks[1], num_node_features, 256),
        "b1": jax.random.uniform(ks[2], (1, 256), jnp.float32, -0.05, 0.05),
        "w2_out": lin(ks[3], 256, 128),
        "w2_root": lin(ks[4], 256, 128),
        "b2": jax.random.uniform(ks[5], (1, 128), jnp.float32, -0.05, 0.05),
        "w3": lin(ks[6], 128, layer_size1),
        "b3": jnp.zeros((1, layer_size1), jnp.float32),
        "w4": lin(ks[7], layer_size1, layer_size2),
        "b4": jnp.zeros((1, layer_size2), jnp.float32),
        "w5": lin(ks[8], layer_size2, num_classes),
        "b5": jnp.zeros((1, num_classes), jnp.float32),
    }


def reference_forward(a_norm, x, params):
    """Pure-JAX reference with the same bf16-operand / f32-accumulate policy."""
    def mm(a, b):
        return jnp.dot(a.astype(jnp.bfloat16), b.astype(jnp.bfloat16),
                       preferred_element_type=jnp.float32)
    agg1 = mm(a_norm, x)
    h = _leaky_relu(mm(agg1, params["w1_out"]) + mm(x, params["w1_root"])
                    + params["b1"])
    agg2 = mm(a_norm, h)
    h2 = _leaky_relu(mm(agg2, params["w2_out"]) + mm(h, params["w2_root"])
                     + params["b2"])
    h3 = _leaky_relu(mm(h2, params["w3"]) + params["b3"])
    h4 = _leaky_relu(mm(h3, params["w4"]) + params["b4"])
    return mm(h4, params["w5"]) + params["b5"]


if __name__ == "__main__":
    num_nodes = 300
    num_node_features = 16
    num_classes = 8
    layer_size1 = 64
    layer_size2 = 32

    key = jax.random.PRNGKey(0)
    k_x, k_e, k_p = jax.random.split(key, 3)

    x = jax.random.normal(k_x, (num_nodes, num_node_features), jnp.float32)

    # Deterministic edge_index: bidirectional ring + a few random edges.
    idx = jnp.arange(num_nodes)
    ring_src = jnp.concatenate([idx, (idx + 1) % num_nodes])
    ring_tgt = jnp.concatenate([(idx + 1) % num_nodes, idx])
    rand_src = jax.random.randint(k_e, (32,), 0, num_nodes)
    rand_tgt = jax.random.randint(jax.random.fold_in(k_e, 1), (32,), 0, num_nodes)
    edge_index = jnp.stack([jnp.concatenate([ring_src, rand_src]),
                            jnp.concatenate([ring_tgt, rand_tgt])], axis=0)

    a_norm = build_norm_adj(edge_index, num_nodes)
    params = init_params(k_p, num_node_features, num_classes,
                         layer_size1, layer_size2)
    prep = prepare_params(params, num_classes)

    out = cluster_gcn_dnn_forward(a_norm, x, prep)
    out = jax.block_until_ready(out)

    assert out.shape == (num_nodes, num_classes)
    assert jnp.all(jnp.isfinite(out))

    ref = reference_forward(a_norm, x, params)
    max_err = float(jnp.max(jnp.abs(out - ref)))
    assert max_err < 2e-2, f"max abs err {max_err}"

    print("KERNEL_OK")
</pallas_src>

<mosaic_0001>
module attributes {stable_mosaic.version = 11 : i64} {
  func.func @conv1_kernel(%arg0: i32, %arg1: i32, %arg2: memref<256x256xbf16, #tpu.memory_space<vmem>>, %arg3: memref<256x128xf32, #tpu.memory_space<vmem>>, %arg4: memref<256x128xf32, #tpu.memory_space<vmem>>, %arg5: memref<256x256xbf16, #tpu.memory_space<vmem>>, %arg6: memref<1x256xf32, #tpu.memory_space<vmem>>, %arg7: memref<256x256xf32, #tpu.memory_space<vmem>>, %arg8: memref<256x128xf32, #tpu.memory_space<vmem>>) attributes {dimension_semantics = [#tpu.dimension_semantics<parallel>, #tpu.dimension_semantics<arbitrary>], iteration_bounds = array<i64: 2, 2>, scalar_prefetch = 0 : i64, scratch_operands = 1 : i64, tpu.core_type = #tpu.core_type<tc>, window_params = [{transform_indices = @transform_0, window_bounds = array<i64: 256, 256>}, {transform_indices = @transform_1, window_bounds = array<i64: 256, 128>}, {transform_indices = @transform_2, window_bounds = array<i64: 256, 128>}, {pipeline_mode = #tpu.pipeline_mode<synchronous>, transform_indices = @transform_3, window_bounds = array<i64: 256, 256>}, {pipeline_mode = #tpu.pipeline_mode<synchronous>, transform_indices = @transform_4, window_bounds = array<i64: 1, 256>}, {transform_indices = @transform_5, window_bounds = array<i64: 256, 256>}]} {
    %c0_i32 = arith.constant 0 : i32
    %0 = arith.cmpi eq, %arg1, %c0_i32 : i32
    %1 = arith.extui %0 : i1 to i32
    %c0_i32_0 = arith.constant 0 : i32
    %2 = arith.cmpi ne, %1, %c0_i32_0 : i32
    scf.if %2 {
      %cst_9 = arith.constant 0.000000e+00 : f32
      %13 = vector.broadcast %cst_9 : f32 to vector<256x128xf32>
      %c0_10 = arith.constant 0 : index
      %c0_11 = arith.constant 0 : index
      %14 = vector.load %arg8[%c0_10, %c0_11] : memref<256x128xf32, #tpu.memory_space<vmem>>, vector<256x128xf32>
      tpu.vector_store %arg8[%c0_10, %c0_11], %13 {strides = array<i32>} : memref<256x128xf32, #tpu.memory_space<vmem>>, vector<256x128xf32>,
    } else {
    }
    %c0 = arith.constant 0 : index
    %c0_1 = arith.constant 0 : index
    %3 = vector.load %arg8[%c0, %c0_1] : memref<256x128xf32, #tpu.memory_space<vmem>>, vector<256x128xf32>
    %c0_2 = arith.constant 0 : index
    %c0_3 = arith.constant 0 : index
    %4 = vector.load %arg2[%c0_2, %c0_3] : memref<256x256xbf16, #tpu.memory_space<vmem>>, vector<256x256xbf16>
    %c0_4 = arith.constant 0 : index
    %c0_5 = arith.constant 0 : index
    %5 = vector.load %arg3[%c0_4, %c0_5] : memref<256x128xf32, #tpu.memory_space<vmem>>, vector<256x128xf32>
    %6 = arith.truncf %5 : vector<256x128xf32> to vector<256x128xbf16>
    %cst = arith.constant dense<0.000000e+00> : vector<256x128xf32>
    %7 = tpu.matmul %4, %6, %cst {dimension_numbers = #tpu.dot_dimension_numbers<[1], [0], [0], [1], [0, 0, 1, 1], [], []>} : vector<256x256xbf16>, vector<256x128xbf16>, vector<256x128xf32> -> vector<256x128xf32>
    %8 = arith.addf %3, %7 : vector<256x128xf32>
    %c0_6 = arith.constant 0 : index
    %c0_7 = arith.constant 0 : index
    %9 = vector.load %arg8[%c0_6, %c0_7] : memref<256x128xf32, #tpu.memory_space<vmem>>, vector<256x128xf32>
    tpu.vector_store %arg8[%c0_6, %c0_7], %8 {strides = array<i32>} : memref<256x128xf32, #tpu.memory_space<vmem>>, vector<256x128xf32>,
    %c1_i32 = arith.constant 1 : i32
    %10 = arith.cmpi eq, %arg1, %c1_i32 : i32
    %11 = arith.extui %10 : i1 to i32
    %c0_i32_8 = arith.constant 0 : i32
    %12 = arith.cmpi ne, %11, %c0_i32_8 : i32
    scf.if %12 {
      %c0_9 = arith.constant 0 : index
      %c0_10 = arith.constant 0 : index
      %13 = vector.load %arg8[%c0_9, %c0_10] : memref<256x128xf32, #tpu.memory_space<vmem>>, vector<256x128xf32>
      %14 = arith.truncf %13 : vector<256x128xf32> to vector<256x128xbf16>
      %c0_11 = arith.constant 0 : index
      %c0_12 = arith.constant 0 : index
      %15 = vector.load %arg4[%c0_11, %c0_12] : memref<256x128xf32, #tpu.memory_space<vmem>>, vector<256x128xf32>
      %16 = arith.truncf %15 : vector<256x128xf32> to vector<256x128xbf16>
      %17 = tpu.concatenate %14, %16 in 1 : vector<256x128xbf16>, vector<256x128xbf16> -> vector<256x256xbf16>
      %c0_13 = arith.constant 0 : index
      %c0_14 = arith.constant 0 : index
      %18 = vector.load %arg5[%c0_13, %c0_14] : memref<256x256xbf16, #tpu.memory_space<vmem>>, vector<256x256xbf16>
      %cst_15 = arith.constant dense<0.000000e+00> : vector<256x256xf32>
      %19 = tpu.matmul %17, %18, %cst_15 {dimension_numbers = #tpu.dot_dimension_numbers<[1], [0], [0], [1], [0, 0, 1, 1], [], []>} : vector<256x256xbf16>, vector<256x256xbf16>, vector<256x256xf32> -> vector<256x256xf32>
      %c0_16 = arith.constant 0 : index
      %c0_17 = arith.constant 0 : index
      %20 = vector.load %arg6[%c0_16, %c0_17] : memref<1x256xf32, #tpu.memory_space<vmem>>, vector<1x256xf32>
      %21 = vector.broadcast %20 : vector<1x256xf32> to vector<256x256xf32>
      %22 = arith.addf %19, %21 : vector<256x256xf32>
      %cst_18 = arith.constant 0.000000e+00 : f32
      %23 = vector.broadcast %cst_18 : f32 to vector<256x256xf32>
      %24 = arith.cmpf ogt, %22, %23 : vector<256x256xf32>
      %cst_19 = arith.constant 0.00999999977 : f32
      %25 = vector.broadcast %cst_19 : f32 to vector<256x256xf32>
      %26 = arith.mulf %25, %22 : vector<256x256xf32>
      %27 = arith.select %24, %22, %26 : vector<256x256xi1>, vector<256x256xf32>
      %c0_20 = arith.constant 0 : index
      %c0_21 = arith.constant 0 : index
      %28 = vector.load %arg7[%c0_20, %c0_21] : memref<256x256xf32, #tpu.memory_space<vmem>>, vector<256x256xf32>
      tpu.vector_store %arg7[%c0_20, %c0_21], %27 {strides = array<i32>} : memref<256x256xf32, #tpu.memory_space<vmem>>, vector<256x256xf32>,
    } else {
    }
    return
  }
  func.func @transform_0(%arg0: i32, %arg1: i32) -> (i32, i32) {
    %c0_i32 = arith.constant 0 : i32
    return %arg0, %arg1 : i32, i32
  }
  func.func @transform_1(%arg0: i32, %arg1: i32) -> (i32, i32) {
    %c0_i32 = arith.constant 0 : i32
    %c0_i32_0 = arith.constant 0 : i32
    return %arg1, %c0_i32 : i32, i32
  }
  func.func @transform_2(%arg0: i32, %arg1: i32) -> (i32, i32) {
    %c0_i32 = arith.constant 0 : i32
    %c0_i32_0 = arith.constant 0 : i32
    return %arg0, %c0_i32 : i32, i32
  }
  func.func @transform_3(%arg0: i32, %arg1: i32) -> (i32, i32) {
    %c0_i32 = arith.constant 0 : i32
    %c0_i32_0 = arith.constant 0 : i32
    %c0_i32_1 = arith.constant 0 : i32
    return %c0_i32, %c0_i32_0 : i32, i32
  }
  func.func @transform_4(%arg0: i32, %arg1: i32) -> (i32, i32) {
    %c0_i32 = arith.constant 0 : i32
    %c0_i32_0 = arith.constant 0 : i32
    %c0_i32_1 = arith.constant 0 : i32
    return %c0_i32, %c0_i32_0 : i32, i32
  }
  func.func @transform_5(%arg0: i32, %arg1: i32) -> (i32, i32) {
    %c0_i32 = arith.constant 0 : i32
    %c0_i32_0 = arith.constant 0 : i32
    return %arg0, %c0_i32 : i32, i32
  }
}

</mosaic_0001>

<llo_original>
// kernel: tpu_custom_call.1
$region0: #{tpu_custom_call.1}
  #allocation0 [shape = 'u32[]', space=smem, size = 0x4, offset = 0x4, fixed_abs, tag = 'smem constant byte address 0x4 - core index']
  #allocation1 [shape = 'u32[144,128]{1,0:T(1,128)}', space=vmem, size = 0x12000, scoped, tag = 'internal scratch']
  #allocation2 [shape = 'f32[256,128]{1,0:T(8,128)}', space=vmem, size = 0x20000, scoped, tag = 'scratch operand']
  %s0 = inlined_call_operand.hbm [shape: bf16[512,512], index: 0, kind: input, shape index: {}]
  %s1 = inlined_call_operand.hbm [shape: f32[512,128], index: 1, kind: input, shape index: {}]
  %s2 = inlined_call_operand.hbm [shape: f32[512,128], index: 2, kind: input, shape index: {}]
  %s3 = inlined_call_operand.hbm [shape: bf16[256,256], index: 3, kind: input, shape index: {}]
  %s4 = inlined_call_operand.vmem [shape: f32[1,256], index: 4, kind: input, shape index: {}]
  %s5 = inlined_call_operand.hbm [shape: f32[512,256], index: 5, kind: output, shape index: {}]
  %s6 = sld [smem:[#allocation0]]
  $region77: #{tpu_custom_call.1} parent=0
    _
  %s8 = ssub.s32 1, %s6
  %s9 = scalar_select 0, %s8, %s6
  $region1: #{tpu_custom_call.1} parent=0
    #allocation3 [shape = 'u8[262144]{0}', space=vmem, size = 0x40000, scoped, tag = 'input window, operand 0']
    #allocation4 [shape = 's32[2]{0}', space=sflag, size = 0x8, scoped, tag = 'scoped memory for tpu_custom_call.1']
    #allocation5 [shape = 's32[2]{0}', space=sflag, size = 0x8, scoped, tag = 'scoped memory for tpu_custom_call.1']
    #allocation6 [shape = 'u8[262144]{0}', space=vmem, size = 0x40000, scoped, tag = 'input window, operand 1']
    #allocation7 [shape = 's32[2]{0}', space=sflag, size = 0x8, scoped, tag = 'scoped memory for tpu_custom_call.1']
    #allocation8 [shape = 'u8[262144]{0}', space=vmem, size = 0x40000, scoped, tag = 'input window, operand 2']
    #allocation9 [shape = 'u8[131072]{0}', space=vmem, size = 0x20000, scoped, tag = 'input window, operand 3, single buffered']
    #allocation10 [shape = 's32[1]{0}', space=sflag, size = 0x4, scoped, tag = 'scoped memory for tpu_custom_call.1']
    #allocation11 [shape = 'u8[524288]{0}', space=vmem, size = 0x80000, scoped, tag = 'output window, operand 0']
    %10 = vsyncpa [#allocation4], 0
    %s11 = scalar_lea.sflag [#allocation4], 1
    %12 = vsyncpa %s11, 0
    %13 = vsyncpa [#allocation7], 0
    %s14 = scalar_lea.sflag [#allocation7], 1
    %15 = vsyncpa %s14, 0
    %16 = vsyncpa [#allocation10], 0
    %17 = vsyncpa [#allocation5], 0
    %s18 = scalar_lea.sflag [#allocation5], 1
    %19 = vsyncpa %s18, 0
    loop: start=0, step=1, limit=6
    $region2: #{tpu_custom_call.1} parent=1 // loop_pre_header
      _
    $region3: #{tpu_custom_call.1} parent=1 // loop_header
      %s21 = sphi 0, %s25
      %p22 = scmp.ge.s32.totalorder %s21, 6
      %s28 = sphi 0, %s40
      %s29 = sphi 0, %s36
      %s30 = sphi 0, %s28
      %s31 = sphi 0, %s29
      %s32 = sphi 0, %s30
      %s33 = sphi 0, %s31
      %s45 = sphi 0, %s47
      %s48 = sphi 0, %s45
      %s49 = sphi 0, %s48
      %s65 = sphi 0, %s49
      %s71 = sphi 0, %s73
      %s74 = sphi 0, %s71
      %s75 = sphi 0, %s74
      %s91 = sphi 0, %s75
      %s97 = sphi 0, %s99
      %s100 = sphi 0, %s97
      %s101 = sphi 0, %s100
      %s117 = sphi 0, %s101
      %s121 = sphi 0, %s121
      %s123 = sphi 0, %s121
      %s124 = sphi 0, %s123
      %s138 = sphi 0, %s124
      %s142 = sphi 0, %s142
      %s144 = sphi 0, %s142
      %s145 = sphi 0, %s144
      %s159 = sphi 0, %s145
      %s165 = sphi 0, %s167
      %s168 = sphi 0, %s165
      %s169 = sphi 0, %s168
      %s185 = sphi 0, %s169
    $region4: #{tpu_custom_call.1} parent=1 // loop_header_branch
      %24 = sbr.rel (%p22) target = $region8
    $region5: #{tpu_custom_call.1} parent=1 // loop_body
      %s26 = ssub.s32 %s21, 1
      %s27 = ssub.s32 %s21, 2
      %s34 = sadd.s32 1, %s29
      %p35 = scmp.ge.s32.totalorder %s34, 2
      %s36 = scalar_select %p35, 0, %s34
      %s37 = sadd.s32 1, %s28
      %s38 = scalar_select %p35, %s37, %s28
      %p39 = scmp.ge.s32.totalorder %s38, 2
      %s40 = scalar_select %p39, 0, %s38
      %s41 = ssub.s32 %s28, %s40
      %s42 = ssub.s32 %s29, %s36
      %s43 = sor.u32 %s41, %s42
      %p44 = scmp.eq.s32.totalorder %s43, 0
      %s46 = sadd.s32 %s45, 1
      %s47 = scalar_select %p44, %s45, %s46
      %p50 = pneg %p44
      %p51 = scmp.eq.s32.totalorder %s21, 3
      %p52 = por %p50, %p51
      %p53 = scmp.ne.s32.totalorder %s45, %s48
      %p54 = scmp.eq.s32.totalorder %s21, 0
      %p55 = por %p53, %p54
      %p56 = scmp.ne.s32.totalorder %s45, %s48
      %p57 = scmp.eq.s32.totalorder %s26, 3
      %p58 = por %p56, %p57
      %p59 = scmp.ne.s32.totalorder %s48, %s49
      %p60 = scmp.eq.s32.totalorder %s26, 0
      %p61 = por %p59, %p60
      %p62 = scmp.ne.s32.totalorder %s48, %s49
      %p63 = scmp.eq.s32.totalorder %s27, 3
      %p64 = por %p62, %p63
      %p66 = scmp.ne.s32.totalorder %s49, %s65
      %p67 = scmp.eq.s32.totalorder %s27, 0
      %p68 = por %p66, %p67
      %s69 = ssub.s32 %s29, %s36
      %p70 = scmp.eq.s32.totalorder %s69, 0
      %s72 = sadd.s32 %s71, 1
      %s73 = scalar_select %p70, %s71, %s72
      %p76 = pneg %p70
      %p77 = scmp.eq.s32.totalorder %s21, 3
      %p78 = por %p76, %p77
      %p79 = scmp.ne.s32.totalorder %s71, %s74
      %p80 = scmp.eq.s32.totalorder %s21, 0
      %p81 = por %p79, %p80
      %p82 = scmp.ne.s32.totalorder %s71, %s74
      %p83 = scmp.eq.s32.totalorder %s26, 3
      %p84 = por %p82, %p83
      %p85 = scmp.ne.s32.totalorder %s74, %s75
      %p86 = scmp.eq.s32.totalorder %s26, 0
      %p87 = por %p85, %p86
      %p88 = scmp.ne.s32.totalorder %s74, %s75
      %p89 = scmp.eq.s32.totalorder %s27, 3
      %p90 = por %p88, %p89
      %p92 = scmp.ne.s32.totalorder %s75, %s91
      %p93 = scmp.eq.s32.totalorder %s27, 0
      %p94 = por %p92, %p93
      %s95 = ssub.s32 %s28, %s40
      %p96 = scmp.eq.s32.totalorder %s95, 0
      %s98 = sadd.s32 %s97, 1
      %s99 = scalar_select %p96, %s97, %s98
      %p102 = pneg %p96
      %p103 = scmp.eq.s32.totalorder %s21, 3
      %p104 = por %p102, %p103
      %p105 = scmp.ne.s32.totalorder %s97, %s100
      %p106 = scmp.eq.s32.totalorder %s21, 0
      %p107 = por %p105, %p106
      %p108 = scmp.ne.s32.totalorder %s97, %s100
      %p109 = scmp.eq.s32.totalorder %s26, 3
      %p110 = por %p108, %p109
      %p111 = scmp.ne.s32.totalorder %s100, %s101
      %p112 = scmp.eq.s32.totalorder %s26, 0
      %p113 = por %p111, %p112
      %p114 = scmp.ne.s32.totalorder %s100, %s101
      %p115 = scmp.eq.s32.totalorder %s27, 3
      %p116 = por %p114, %p115
      %p118 = scmp.ne.s32.totalorder %s101, %s117
      %p119 = scmp.eq.s32.totalorder %s27, 0
      %p120 = por %p118, %p119
      %s122 = sadd.s32 %s121, 1
      %p125 = scmp.eq.s32.totalorder %s21, 3
      %p126 = scmp.ne.s32.totalorder %s121, %s123
      %p127 = scmp.eq.s32.totalorder %s21, 0
      %p128 = por %p126, %p127
      %p129 = scmp.ne.s32.totalorder %s121, %s123
      %p130 = scmp.eq.s32.totalorder %s26, 3
      %p131 = por %p129, %p130
      %p132 = scmp.ne.s32.totalorder %s123, %s124
      %p133 = scmp.eq.s32.totalorder %s26, 0
      %p134 = por %p132, %p133
      %p135 = scmp.ne.s32.totalorder %s123, %s124
      %p136 = scmp.eq.s32.totalorder %s27, 3
      %p137 = por %p135, %p136
      %p139 = scmp.ne.s32.totalorder %s124, %s138
      %p140 = scmp.eq.s32.totalorder %s27, 0
      %p141 = por %p139, %p140
      %s143 = sadd.s32 %s142, 1
      %p146 = scmp.eq.s32.totalorder %s21, 3
      %p147 = scmp.ne.s32.totalorder %s142, %s144
      %p148 = scmp.eq.s32.totalorder %s21, 0
      %p149 = por %p147, %p148
      %p150 = scmp.ne.s32.totalorder %s142, %s144
      %p151 = scmp.eq.s32.totalorder %s26, 3
      %p152 = por %p150, %p151
      %p153 = scmp.ne.s32.totalorder %s144, %s145
      %p154 = scmp.eq.s32.totalorder %s26, 0
      %p155 = por %p153, %p154
      %p156 = scmp.ne.s32.totalorder %s144, %s145
      %p157 = scmp.eq.s32.totalorder %s27, 3
      %p158 = por %p156, %p157
      %p160 = scmp.ne.s32.totalorder %s145, %s159
      %p161 = scmp.eq.s32.totalorder %s27, 0
      %p162 = por %p160, %p161
      %s163 = ssub.s32 %s28, %s40
      %p164 = scmp.eq.s32.totalorder %s163, 0
      %s166 = sadd.s32 %s165, 1
      %s167 = scalar_select %p164, %s165, %s166
      %p170 = pneg %p164
      %p171 = scmp.eq.s32.totalorder %s21, 3
      %p172 = por %p170, %p171
      %p173 = scmp.ne.s32.totalorder %s165, %s168
      %p174 = scmp.eq.s32.totalorder %s21, 0
      %p175 = por %p173, %p174
      %p176 = scmp.ne.s32.totalorder %s165, %s168
      %p177 = scmp.eq.s32.totalorder %s26, 3
      %p178 = por %p176, %p177
      %p179 = scmp.ne.s32.totalorder %s168, %s169
      %p180 = scmp.eq.s32.totalorder %s26, 0
      %p181 = por %p179, %p180
      %p182 = scmp.ne.s32.totalorder %s168, %s169
      %p183 = scmp.eq.s32.totalorder %s27, 3
      %p184 = por %p182, %p183
      %p186 = scmp.ne.s32.totalorder %s169, %s185
      %p187 = scmp.eq.s32.totalorder %s27, 0
      %p188 = por %p186, %p187
      %p189 = scmp.le.s32.totalorder 1, %s21
      %p190 = scmp.lt.s32.totalorder %s21, 5
      %p191 = pnand %p189, %p190
      %p192 = pneg %p191
      // Predicated region
      $region9: #{tpu_custom_call.1} parent=5 // pred_check
        _
      $region10: #{tpu_custom_call.1} parent=5 // pred_check_branch
        %194 = sbr.rel (%p191) target = $region12
      $region11: #{tpu_custom_call.1} parent=5 // pred_region
        %s195 = ssub.s32 %s21, 1
        // Predicated region
        $region13: #{tpu_custom_call.1} parent=11 // pred_check
          %p196 = pneg %p134
        $region14: #{tpu_custom_call.1} parent=11 // pred_check_branch
          %198 = sbr.rel (%p196) target = $region16
        $region15: #{tpu_custom_call.1} parent=11 // pred_region
          %s200 = ssub.s32 4096, 4096
          %201 = vsyncadd [#allocation10], %s200
          %s202 = sshll.u32 [#allocation9], 4
          %s203 = int_to_ptr.vmem [resolvable:$true] %s202
          %208 = dma.hbm_to_vmem [thread:$0]  %s3, 4096, %s203, [#allocation10], 128, 128, 8
        $region16: #{tpu_custom_call.1} parent=11 // pred_fallthru
          _
        // Predicated region
        $region17: #{tpu_custom_call.1} parent=11 // pred_check
          %p209 = pneg %p155
        $region18: #{tpu_custom_call.1} parent=11 // pred_check_branch
          %211 = sbr.rel (%p209) target = $region20
        $region19: #{tpu_custom_call.1} parent=11 // pred_region
          _
        $region20: #{tpu_custom_call.1} parent=11 // pred_fallthru
          _
      $region12: #{tpu_custom_call.1} parent=5 // pred_fallthru
        _
      %p212 = scmp.lt.s32.totalorder %s21, 4
      // Predicated region
      $region21: #{tpu_custom_call.1} parent=5 // pred_check
        %p213 = pneg %p212
      $region22: #{tpu_custom_call.1} parent=5 // pred_check_branch
        %215 = sbr.rel (%p213) target = $region24
      $region23: #{tpu_custom_call.1} parent=5 // pred_region
        // Predicated region
        $region25: #{tpu_custom_call.1} parent=23 // pred_check
          %p216 = pneg %p55
        $region26: #{tpu_custom_call.1} parent=23 // pred_check_branch
          %218 = sbr.rel (%p216) target = $region28
        $region27: #{tpu_custom_call.1} parent=23 // pred_region
          %s219 = sand.u32 %s45, 1
          %s220 = scalar_lea.sflag [#allocation4], %s219
          %s221 = sand.u32 %s45, 1
          %s222 = smul.addr %s221, 256
          %s223 = scalar_lea.vmem [#allocation3], %s222
          %s224 = smul.u32 32, %s28
          %s225 = smul.u32 2, %s29
          %s227 = ssub.s32 4096, 4096
          %228 = vsyncadd %s220, %s227
          %s229 = smul.addr %s224, 4
          %s230 = sadd.s32 %s225, %s229
          %s231 = smul.addr %s230, 64
          %s232 = scalar_lea.hbm %s0, %s231
          %s233 = sshll.u32 %s223, 4
          %s234 = int_to_ptr.vmem [resolvable:$true] %s233
          %239 = dma.hbm_to_vmem [thread:$0]  %s232, 4096, %s234, %s220, 256, 128, 8
        $region28: #{tpu_custom_call.1} parent=23 // pred_fallthru
          _
        // Predicated region
        $region29: #{tpu_custom_call.1} parent=23 // pred_check
          %p240 = pneg %p81
        $region30: #{tpu_custom_call.1} parent=23 // pred_check_branch
          %242 = sbr.rel (%p240) target = $region32
        $region31: #{tpu_custom_call.1} parent=23 // pred_region
          %s243 = sand.u32 %s21, 1
          %s244 = scalar_lea.sflag [#allocation7], %s243
          %s245 = sand.u32 %s71, 1
          %s246 = smul.addr %s245, 256
          %s247 = scalar_lea.vmem [#allocation6], %s246
          %s248 = smul.u32 32, %s29
          %s250 = ssub.s32 4096, 4096
          %251 = vsyncadd %s244, %s250
          %s252 = smul.addr %s248, 128
          %s253 = scalar_lea.hbm %s1, %s252
          %s254 = sshll.u32 %s247, 4
          %s255 = int_to_ptr.vmem [resolvable:$true] %s254
          %260 = dma.hbm_to_vmem [thread:$0]  %s253, 4096, %s255, %s244, 128, 128, 8
        $region32: #{tpu_custom_call.1} parent=23 // pred_fallthru
          _
        // Predicated region
        $region33: #{tpu_custom_call.1} parent=23 // pred_check
          %p261 = pneg %p107
        $region34: #{tpu_custom_call.1} parent=23 // pred_check_branch
          %263 = sbr.rel (%p261) target = $region36
        $region35: #{tpu_custom_call.1} parent=23 // pred_region
          %s264 = sand.u32 %s21, 1
          %s265 = scalar_lea.sflag [#allocation7], %s264
          %s266 = sand.u32 %s97, 1
          %s267 = smul.addr %s266, 256
          %s268 = scalar_lea.vmem [#allocation8], %s267
          %s269 = smul.u32 32, %s28
          %s271 = ssub.s32 4096, 4096
          %272 = vsyncadd %s265, %s271
          %s273 = smul.addr %s269, 128
          %s274 = scalar_lea.hbm %s2, %s273
          %s275 = sshll.u32 %s268, 4
          %s276 = int_to_ptr.vmem [resolvable:$true] %s275
          %281 = dma.hbm_to_vmem [thread:$0]  %s274, 4096, %s276, %s265, 128, 128, 8
        $region36: #{tpu_custom_call.1} parent=23 // pred_fallthru
          _
      $region24: #{tpu_custom_call.1} parent=5 // pred_fallthru
        _
      %p282 = scmp.le.s32.totalorder 1, %s21
      %p283 = scmp.lt.s32.totalorder %s21, 5
      %p284 = pnand %p282, %p283
      %p285 = pneg %p284
      // Predicated region
      $region37: #{tpu_custom_call.1} parent=5 // pred_check
        _
      $region38: #{tpu_custom_call.1} parent=5 // pred_check_branch
        %287 = sbr.rel (%p284) target = $region40
      $region39: #{tpu_custom_call.1} parent=5 // pred_region
        %s288 = ssub.s32 %s21, 1
        %s289 = sand.u32 %s48, 1
        %s290 = scalar_lea.sflag [#allocation4], %s289
        %s291 = sand.u32 %s48, 1
        %s292 = smul.addr %s291, 256
        %s293 = scalar_lea.vmem [#allocation3], %s292
        // Predicated region
        $region41: #{tpu_custom_call.1} parent=39 // pred_check
          %p294 = pneg %p61
        $region42: #{tpu_custom_call.1} parent=39 // pred_check_branch
          %296 = sbr.rel (%p294) target = $region44
        $region43: #{tpu_custom_call.1} parent=39 // pred_region
          %297 = dma.done %s290, 4096
        $region44: #{tpu_custom_call.1} parent=39 // pred_fallthru
          _
        %s298 = sand.u32 %s26, 1
        %s299 = scalar_lea.sflag [#allocation7], %s298
        %s300 = sand.u32 %s74, 1
        %s301 = smul.addr %s300, 256
        %s302 = scalar_lea.vmem [#allocation6], %s301
        // Predicated region
        $region45: #{tpu_custom_call.1} parent=39 // pred_check
          %p303 = pneg %p87
        $region46: #{tpu_custom_call.1} parent=39 // pred_check_branch
          %305 = sbr.rel (%p303) target = $region48
        $region47: #{tpu_custom_call.1} parent=39 // pred_region
          %306 = dma.done %s299, 4096
        $region48: #{tpu_custom_call.1} parent=39 // pred_fallthru
          _
        %s307 = sand.u32 %s26, 1
        %s308 = scalar_lea.sflag [#allocation7], %s307
        %s309 = sand.u32 %s100, 1
        %s310 = smul.addr %s309, 256
        %s311 = scalar_lea.vmem [#allocation8], %s310
        // Predicated region
        $region49: #{tpu_custom_call.1} parent=39 // pred_check
          %p312 = pneg %p113
        $region50: #{tpu_custom_call.1} parent=39 // pred_check_branch
          %314 = sbr.rel (%p312) target = $region52
        $region51: #{tpu_custom_call.1} parent=39 // pred_region
          %315 = dma.done %s308, 4096
        $region52: #{tpu_custom_call.1} parent=39 // pred_fallthru
          _
        // Predicated region
        $region53: #{tpu_custom_call.1} parent=39 // pred_check
          %p316 = pneg %p134
        $region54: #{tpu_custom_call.1} parent=39 // pred_check_branch
          %318 = sbr.rel (%p316) target = $region56
        $region55: #{tpu_custom_call.1} parent=39 // pred_region
          %319 = dma.done [#allocation10], 4096
        $region56: #{tpu_custom_call.1} parent=39 // pred_fallthru
          _
        %s320 = sand.u32 %s48, 1
        %s321 = scalar_lea.sflag [#allocation4], %s320
        %s322 = sand.u32 %s48, 1
        %s323 = smul.addr %s322, 256
        %s324 = scalar_lea.vmem [#allocation3], %s323
        %p325 = pneg %p61
        %p326 = pneg %p58
        %s327 = sand.u32 %s26, 1
        %s328 = scalar_lea.sflag [#allocation7], %s327
        %s329 = sand.u32 %s74, 1
        %s330 = smul.addr %s329, 256
        %s331 = scalar_lea.vmem [#allocation6], %s330
        %p332 = pneg %p87
        %p333 = pneg %p84
        %s334 = sand.u32 %s26, 1
        %s335 = scalar_lea.sflag [#allocation7], %s334
        %s336 = sand.u32 %s100, 1
        %s337 = smul.addr %s336, 256
        %s338 = scalar_lea.vmem [#allocation8], %s337
        %p339 = pneg %p113
        %p340 = pneg %p110
        %p341 = pneg %p134
        %p342 = pneg %p131
        %p343 = pneg %p155
        %p344 = pneg %p152
        %p345 = pneg %p181
        %p346 = pneg %p178
        %s347 = sand.u32 %s168, 1
        %s348 = scalar_lea.sflag [#allocation5], %s347
        %s349 = sand.u32 %s168, 1
        %s350 = smul.addr %s349, 512
        %s351 = scalar_lea.vmem [#allocation11], %s350
        %s352 = smul.u32 32, %s30
        %s353 = smul.u32 2, %s31
        %s354 = smul.u32 32, %s31
        %s355 = smul.u32 32, %s30
        %s356 = smul.u32 32, %s30
        %p358 = scmp.eq.s32.totalorder %s31, 0
        // Predicated region
        $region57: #{tpu_custom_call.1} parent=39 // pred_check
          %p359 = pneg %p358
        $region58: #{tpu_custom_call.1} parent=39 // pred_check_branch
          %361 = sbr.rel (%p359) target = $region60
        $region59: #{tpu_custom_call.1} parent=39 // pred_region
          %362 = vst [vmem:[#allocation2] sm:$0xff] 0.0
          %363 = vst [vmem:[#allocation2 + $0x8] sm:$0xff] 0.0
          %364 = vst [vmem:[#allocation2 + $0x10] sm:$0xff] 0.0
          %365 = vst [vmem:[#allocation2 + $0x18] sm:$0xff] 0.0
          %366 = vst [vmem:[#allocation2 + $0x20] sm:$0xff] 0.0
          %367 = vst [vmem:[#allocation2 + $0x28] sm:$0xff] 0.0
          %368 = vst [vmem:[#allocation2 + $0x30] sm:$0xff] 0.0
          %369 = vst [vmem:[#allocation2 + $0x38] sm:$0xff] 0.0
          %370 = vst [vmem:[#allocation2 + $0x40] sm:$0xff] 0.0
          %371 = vst [vmem:[#allocation2 + $0x48] sm:$0xff] 0.0
          %372 = vst [vmem:[#allocation2 + $0x50] sm:$0xff] 0.0
          %373 = vst [vmem:[#allocation2 + $0x58] sm:$0xff] 0.0
          %374 = vst [vmem:[#allocation2 + $0x60] sm:$0xff] 0.0
          %375 = vst [vmem:[#allocation2 + $0x68] sm:$0xff] 0.0
          %376 = vst [vmem:[#allocation2 + $0x70] sm:$0xff] 0.0
          %377 = vst [vmem:[#allocation2 + $0x78] sm:$0xff] 0.0
          %378 = vst [vmem:[#allocation2 + $0x80] sm:$0xff] 0.0
          %379 = vst [vmem:[#allocation2 + $0x88] sm:$0xff] 0.0
          %380 = vst [vmem:[#allocation2 + $0x90] sm:$0xff] 0.0
          %381 = vst [vmem:[#allocation2 + $0x98] sm:$0xff] 0.0
          %382 = vst [vmem:[#allocation2 + $0xa0] sm:$0xff] 0.0
          %383 = vst [vmem:[#allocation2 + $0xa8] sm:$0xff] 0.0
          %384 = vst [vmem:[#allocation2 + $0xb0] sm:$0xff] 0.0
          %385 = vst [vmem:[#allocation2 + $0xb8] sm:$0xff] 0.0
          %386 = vst [vmem:[#allocation2 + $0xc0] sm:$0xff] 0.0
          %387 = vst [vmem:[#allocation2 + $0xc8] sm:$0xff] 0.0
          %388 = vst [vmem:[#allocation2 + $0xd0] sm:$0xff] 0.0
          %389 = vst [vmem:[#allocation2 + $0xd8] sm:$0xff] 0.0
          %390 = vst [vmem:[#allocation2 + $0xe0] sm:$0xff] 0.0
          %391 = vst [vmem:[#allocation2 + $0xe8] sm:$0xff] 0.0
          %392 = vst [vmem:[#allocation2 + $0xf0] sm:$0xff] 0.0
          %393 = vst [vmem:[#allocation2 + $0xf8] sm:$0xff] 0.0
        $region60: #{tpu_custom_call.1} parent=39 // pred_fallthru
          _
        %v394 = vld [vmem:[#allocation2] sm:$0xff]
        %v395 = vld [vmem:[#allocation2 + $0x8] sm:$0xff]
        %v396 = vld [vmem:[#allocation2 + $0x10] sm:$0xff]
        %v397 = vld [vmem:[#allocation2 + $0x18] sm:$0xff]
        %v398 = vld [vmem:[#allocation2 + $0x20] sm:$0xff]
        %v399 = vld [vmem:[#allocation2 + $0x28] sm:$0xff]
        %v400 = vld [vmem:[#allocation2 + $0x30] sm:$0xff]
        %v401 = vld [vmem:[#allocation2 + $0x38] sm:$0xff]
        %v402 = vld [vmem:[#allocation2 + $0x40] sm:$0xff]
        %v403 = vld [vmem:[#allocation2 + $0x48] sm:$0xff]
        %v404 = vld [vmem:[#allocation2 + $0x50] sm:$0xff]
        %v405 = vld [vmem:[#allocation2 + $0x58] sm:$0xff]
        %v406 = vld [vmem:[#allocation2 + $0x60] sm:$0xff]
        %v407 = vld [vmem:[#allocation2 + $0x68] sm:$0xff]
        %v408 = vld [vmem:[#allocation2 + $0x70] sm:$0xff]
        %v409 = vld [vmem:[#allocation2 + $0x78] sm:$0xff]
        %v410 = vld [vmem:[#allocation2 + $0x80] sm:$0xff]
        %v411 = vld [vmem:[#allocation2 + $0x88] sm:$0xff]
        %v412 = vld [vmem:[#allocation2 + $0x90] sm:$0xff]
        %v413 = vld [vmem:[#allocation2 + $0x98] sm:$0xff]
        %v414 = vld [vmem:[#allocation2 + $0xa0] sm:$0xff]
        %v415 = vld [vmem:[#allocation2 + $0xa8] sm:$0xff]
        %v416 = vld [vmem:[#allocation2 + $0xb0] sm:$0xff]
        %v417 = vld [vmem:[#allocation2 + $0xb8] sm:$0xff]
        %v418 = vld [vmem:[#allocation2 + $0xc0] sm:$0xff]
        %v419 = vld [vmem:[#allocation2 + $0xc8] sm:$0xff]
        %v420 = vld [vmem:[#allocation2 + $0xd0] sm:$0xff]
        %v421 = vld [vmem:[#allocation2 + $0xd8] sm:$0xff]
        %v422 = vld [vmem:[#allocation2 + $0xe0] sm:$0xff]
        %v423 = vld [vmem:[#allocation2 + $0xe8] sm:$0xff]
        %v424 = vld [vmem:[#allocation2 + $0xf0] sm:$0xff]
        %v425 = vld [vmem:[#allocation2 + $0xf8] sm:$0xff]
        %v426 = vld [vmem:[%s293] sm:$0xff]
        %v427 = vld [vmem:[%s293 + $0x8] sm:$0xff]
        %v428 = vld [vmem:[%s293 + $0x10] sm:$0xff]
        %v429 = vld [vmem:[%s293 + $0x18] sm:$0xff]
        %v430 = vld [vmem:[%s293 + $0x20] sm:$0xff]
        %v431 = vld [vmem:[%s293 + $0x28] sm:$0xff]
        %v432 = vld [vmem:[%s293 + $0x30] sm:$0xff]
        %v433 = vld [vmem:[%s293 + $0x38] sm:$0xff]
        %v434 = vld [vmem:[%s293 + $0x40] sm:$0xff]
        %v435 = vld [vmem:[%s293 + $0x48] sm:$0xff]
        %v436 = vld [vmem:[%s293 + $0x50] sm:$0xff]
        %v437 = vld [vmem:[%s293 + $0x58] sm:$0xff]
        %v438 = vld [vmem:[%s293 + $0x60] sm:$0xff]
        %v439 = vld [vmem:[%s293 + $0x68] sm:$0xff]
        %v440 = vld [vmem:[%s293 + $0x70] sm:$0xff]
        %v441 = vld [vmem:[%s293 + $0x78] sm:$0xff]
        %v442 = vld [vmem:[%s293 + $0x80] sm:$0xff]
        %v443 = vld [vmem:[%s293 + $0x88] sm:$0xff]
        %v444 = vld [vmem:[%s293 + $0x90] sm:$0xff]
        %v445 = vld [vmem:[%s293 + $0x98] sm:$0xff]
        %v446 = vld [vmem:[%s293 + $0xa0] sm:$0xff]
        %v447 = vld [vmem:[%s293 + $0xa8] sm:$0xff]
        %v448 = vld [vmem:[%s293 + $0xb0] sm:$0xff]
        %v449 = vld [vmem:[%s293 + $0xb8] sm:$0xff]
        %v450 = vld [vmem:[%s293 + $0xc0] sm:$0xff]
        %v451 = vld [vmem:[%s293 + $0xc8] sm:$0xff]
        %v452 = vld [vmem:[%s293 + $0xd0] sm:$0xff]
        %v453 = vld [vmem:[%s293 + $0xd8] sm:$0xff]
        %v454 = vld [vmem:[%s293 + $0xe0] sm:$0xff]
        %v455 = vld [vmem:[%s293 + $0xe8] sm:$0xff]
        %v456 = vld [vmem:[%s293 + $0xf0] sm:$0xff]
        %v457 = vld [vmem:[%s293 + $0xf8] sm:$0xff]
        %v458 = vld [vmem:[%s302] sm:$0xff]
        %v459 = vld [vmem:[%s302 + $0x8] sm:$0xff]
        %v460 = vld [vmem:[%s302 + $0x10] sm:$0xff]
        %v461 = vld [vmem:[%s302 + $0x18] sm:$0xff]
        %v462 = vld [vmem:[%s302 + $0x20] sm:$0xff]
        %v463 = vld [vmem:[%s302 + $0x28] sm:$0xff]
        %v464 = vld [vmem:[%s302 + $0x30] sm:$0xff]
        %v465 = vld [vmem:[%s302 + $0x38] sm:$0xff]
        %v466 = vld [vmem:[%s302 + $0x40] sm:$0xff]
        %v467 = vld [vmem:[%s302 + $0x48] sm:$0xff]
        %v468 = vld [vmem:[%s302 + $0x50] sm:$0xff]
        %v469 = vld [vmem:[%s302 + $0x58] sm:$0xff]
        %v470 = vld [vmem:[%s302 + $0x60] sm:$0xff]
        %v471 = vld [vmem:[%s302 + $0x68] sm:$0xff]
        %v472 = vld [vmem:[%s302 + $0x70] sm:$0xff]
        %v473 = vld [vmem:[%s302 + $0x78] sm:$0xff]
        %v474 = vld [vmem:[%s302 + $0x80] sm:$0xff]
        %v475 = vld [vmem:[%s302 + $0x88] sm:$0xff]
        %v476 = vld [vmem:[%s302 + $0x90] sm:$0xff]
        %v477 = vld [vmem:[%s302 + $0x98] sm:$0xff]
        %v478 = vld [vmem:[%s302 + $0xa0] sm:$0xff]
        %v479 = vld [vmem:[%s302 + $0xa8] sm:$0xff]
        %v480 = vld [vmem:[%s302 + $0xb0] sm:$0xff]
        %v481 = vld [vmem:[%s302 + $0xb8] sm:$0xff]
        %v482 = vld [vmem:[%s302 + $0xc0] sm:$0xff]
        %v483 = vld [vmem:[%s302 + $0xc8] sm:$0xff]
        %v484 = vld [vmem:[%s302 + $0xd0] sm:$0xff]
        %v485 = vld [vmem:[%s302 + $0xd8] sm:$0xff]
        %v486 = vld [vmem:[%s302 + $0xe0] sm:$0xff]
        %v487 = vld [vmem:[%s302 + $0xe8] sm:$0xff]
        %v488 = vld [vmem:[%s302 + $0xf0] sm:$0xff]
        %v489 = vld [vmem:[%s302 + $0xf8] sm:$0xff]
        %v490 = vpack.c.bf16 %v459, %v458
        %v491 = vpack.c.bf16 %v461, %v460
        %v492 = vpack.c.bf16 %v463, %v462
        %v493 = vpack.c.bf16 %v465, %v464
        %v494 = vpack.c.bf16 %v467, %v466
        %v495 = vpack.c.bf16 %v469, %v468
        %v496 = vpack.c.bf16 %v471, %v470
        %v497 = vpack.c.bf16 %v473, %v472
        %v498 = vpack.c.bf16 %v475, %v474
        %v499 = vpack.c.bf16 %v477, %v476
        %v500 = vpack.c.bf16 %v479, %v478
        %v501 = vpack.c.bf16 %v481, %v480
        %v502 = vpack.c.bf16 %v483, %v482
        %v503 = vpack.c.bf16 %v485, %v484
        %v504 = vpack.c.bf16 %v487, %v486
        %v505 = vpack.c.bf16 %v489, %v488
        %v538 = vunpack.c.l.b16 %v426
        %v539 = vunpack.c.h.b16 %v426
        %v540 = vunpack.c.l.b16 %v427
        %v541 = vunpack.c.h.b16 %v427
        %v542 = vunpack.c.l.b16 %v428
        %v543 = vunpack.c.h.b16 %v428
        %v544 = vunpack.c.l.b16 %v429
        %v545 = vunpack.c.h.b16 %v429
        %v546 = vunpack.c.l.b16 %v430
        %v547 = vunpack.c.h.b16 %v430
        %v548 = vunpack.c.l.b16 %v431
        %v549 = vunpack.c.h.b16 %v431
        %v550 = vunpack.c.l.b16 %v432
        %v551 = vunpack.c.h.b16 %v432
        %v552 = vunpack.c.l.b16 %v433
        %v553 = vunpack.c.h.b16 %v433
        %v554 = vunpack.c.l.b16 %v434
        %v555 = vunpack.c.h.b16 %v434
        %v556 = vunpack.c.l.b16 %v435
        %v557 = vunpack.c.h.b16 %v435
        %v558 = vunpack.c.l.b16 %v436
        %v559 = vunpack.c.h.b16 %v436
        %v560 = vunpack.c.l.b16 %v437
        %v561 = vunpack.c.h.b16 %v437
        %v562 = vunpack.c.l.b16 %v438
        %v563 = vunpack.c.h.b16 %v438
        %v564 = vunpack.c.l.b16 %v439
        %v565 = vunpack.c.h.b16 %v439
        %v566 = vunpack.c.l.b16 %v440
        %v567 = vunpack.c.h.b16 %v440
        %v568 = vunpack.c.l.b16 %v441
        %v569 = vunpack.c.h.b16 %v441
        %v570 = vunpack.c.l.b16 %v442
        %v571 = vunpack.c.h.b16 %v442
        %v572 = vunpack.c.l.b16 %v443
        %v573 = vunpack.c.h.b16 %v443
        %v574 = vunpack.c.l.b16 %v444
        %v575 = vunpack.c.h.b16 %v444
        %v576 = vunpack.c.l.b16 %v445
        %v577 = vunpack.c.h.b16 %v445
        %v578 = vunpack.c.l.b16 %v446
        %v579 = vunpack.c.h.b16 %v446
        %v580 = vunpack.c.l.b16 %v447
        %v581 = vunpack.c.h.b16 %v447
        %v582 = vunpack.c.l.b16 %v448
        %v583 = vunpack.c.h.b16 %v448
        %v584 = vunpack.c.l.b16 %v449
        %v585 = vunpack.c.h.b16 %v449
        %v586 = vunpack.c.l.b16 %v450
        %v587 = vunpack.c.h.b16 %v450
        %v588 = vunpack.c.l.b16 %v451
        %v589 = vunpack.c.h.b16 %v451
        %v590 = vunpack.c.l.b16 %v452
        %v591 = vunpack.c.h.b16 %v452
        %v592 = vunpack.c.l.b16 %v453
        %v593 = vunpack.c.h.b16 %v453
        %v594 = vunpack.c.l.b16 %v454
        %v595 = vunpack.c.h.b16 %v454
        %v596 = vunpack.c.l.b16 %v455
        %v597 = vunpack.c.h.b16 %v455
        %v598 = vunpack.c.l.b16 %v456
        %v599 = vunpack.c.h.b16 %v456
        %v600 = vunpack.c.l.b16 %v457
        %v601 = vunpack.c.h.b16 %v457
        %v602 = vpack.c.b16 %v540, %v538
        %v603 = vpack.c.b16 %v541, %v539
        %v604 = vpack.c.b16 %v544, %v542
        %v605 = vpack.c.b16 %v545, %v543
        %v606 = vpack.c.b16 %v548, %v546
        %v607 = vpack.c.b16 %v549, %v547
        %v608 = vpack.c.b16 %v552, %v550
        %v609 = vpack.c.b16 %v553, %v551
        %v610 = vpack.c.b16 %v556, %v554
        %v611 = vpack.c.b16 %v557, %v555
        %v612 = vpack.c.b16 %v560, %v558
        %v613 = vpack.c.b16 %v561, %v559
        %v614 = vpack.c.b16 %v564, %v562
        %v615 = vpack.c.b16 %v565, %v563
        %v616 = vpack.c.b16 %v568, %v566
        %v617 = vpack.c.b16 %v569, %v567
        %v618 = vpack.c.b16 %v572, %v570
        %v619 = vpack.c.b16 %v573, %v571
        %v620 = vpack.c.b16 %v576, %v574
        %v621 = vpack.c.b16 %v577, %v575
        %v622 = vpack.c.b16 %v580, %v578
        %v623 = vpack.c.b16 %v581, %v579
        %v624 = vpack.c.b16 %v584, %v582
        %v625 = vpack.c.b16 %v585, %v583
        %v626 = vpack.c.b16 %v588, %v586
        %v627 = vpack.c.b16 %v589, %v587
        %v628 = vpack.c.b16 %v592, %v590
        %v629 = vpack.c.b16 %v593, %v591
        %v630 = vpack.c.b16 %v596, %v594
        %v631 = vpack.c.b16 %v597, %v595
        %v632 = vpack.c.b16 %v600, %v598
        %v633 = vpack.c.b16 %v601, %v599
        %666 = vmatprep.subr.bf16.mxu0 0
        %667 = vmatpush1.bf16.msra.mxu0 %v490
        %668 = vmatprep.subr.bf16.mxu0 0
        %669 = vmatpush1.bf16.msra.mxu0 %v491
        %670 = vmatprep.subr.bf16.mxu0 0
        %671 = vmatpush1.bf16.msra.mxu0 %v492
        %672 = vmatprep.subr.bf16.mxu0 0
        %673 = vmatpush1.bf16.msra.mxu0 %v493
        %674 = vmatprep.subr.bf16.mxu0 0
        %675 = vmatpush1.bf16.msra.mxu0 %v494
        %676 = vmatprep.subr.bf16.mxu0 0
        %677 = vmatpush1.bf16.msra.mxu0 %v495
        %678 = vmatprep.subr.bf16.mxu0 0
        %679 = vmatpush1.bf16.msra.mxu0 %v496
        %680 = vmatprep.subr.bf16.mxu0 0
        %681 = vmatpush1.bf16.msra.mxu0 %v497
        %682 = vmatprep.subr.bf16.mxu0 0
        %683 = vmatpush1.bf16.msra.mxu0 %v498
        %684 = vmatprep.subr.bf16.mxu0 0
        %685 = vmatpush1.bf16.msra.mxu0 %v499
        %686 = vmatprep.subr.bf16.mxu0 0
        %687 = vmatpush1.bf16.msra.mxu0 %v500
        %688 = vmatprep.subr.bf16.mxu0 0
        %689 = vmatpush1.bf16.msra.mxu0 %v501
        %690 = vmatprep.subr.bf16.mxu0 0
        %691 = vmatpush1.bf16.msra.mxu0 %v502
        %692 = vmatprep.subr.bf16.mxu0 0
        %693 = vmatpush1.bf16.msra.mxu0 %v503
        %694 = vmatprep.subr.bf16.mxu0 0
        %695 = vmatpush1.bf16.msra.mxu0 %v504
        %696 = vmatprep.subr.bf16.mxu0 0
        %697 = vmatpush1.bf16.msra.mxu0 %v505
        %698 = vmatprep.mubr.bf16.mxu0 %v603
        %699 = vmatmul.mubr.bf16.gmra.mrb[0].mxu0 %v602
        %v700 = vpop.f32.mrb[0].mxu0
        %v701 = vadd.f32 0.0, %v700
        %v702 = vpop.f32.mrb[0].mxu0
        %v703 = vpop.f32.mrb[0].mxu0
        %v704 = vadd.f32 0.0, %v703
        %v705 = vpop.f32.mrb[0].mxu0
        %706 = vmatprep.mubr.bf16.mxu0 %v605
        %707 = vmatmul.mubr.bf16.gmra.mrb[0].mxu0 %v604
        %v708 = vpop.f32.mrb[0].mxu0
        %v709 = vadd.f32 0.0, %v708
        %v710 = vpop.f32.mrb[0].mxu0
        %v711 = vpop.f32.mrb[0].mxu0
        %v712 = vadd.f32 0.0, %v711
        %v713 = vpop.f32.mrb[0].mxu0
        %714 = vmatprep.mubr.bf16.mxu0 %v607
        %715 = vmatmul.mubr.bf16.gmra.mrb[0].mxu0 %v606
        %v716 = vpop.f32.mrb[0].mxu0
        %v717 = vadd.f32 0.0, %v716
        %v718 = vpop.f32.mrb[0].mxu0
        %v719 = vpop.f32.mrb[0].mxu0
        %v720 = vadd.f32 0.0, %v719
        %v721 = vpop.f32.mrb[0].mxu0
        %722 = vmatprep.mubr.bf16.mxu0 %v609
        %723 = vmatmul.mubr.bf16.gmra.mrb[0].mxu0 %v608
        %v724 = vpop.f32.mrb[0].mxu0
        %v725 = vadd.f32 0.0, %v724
        %v726 = vpop.f32.mrb[0].mxu0
        %v727 = vpop.f32.mrb[0].mxu0
        %v728 = vadd.f32 0.0, %v727
        %v729 = vpop.f32.mrb[0].mxu0
        %730 = vmatprep.mubr.bf16.mxu0 %v611
        %731 = vmatmul.mubr.bf16.gmra.mrb[0].mxu0 %v610
        %v732 = vpop.f32.mrb[0].mxu0
        %v733 = vadd.f32 0.0, %v732
        %v734 = vpop.f32.mrb[0].mxu0
        %v735 = vpop.f32.mrb[0].mxu0
        %v736 = vadd.f32 0.0, %v735
        %v737 = vpop.f32.mrb[0].mxu0
        %738 = vmatprep.mubr.bf16.mxu0 %v613
        %739 = vmatmul.mubr.bf16.gmra.mrb[0].mxu0 %v612
        %v740 = vpop.f32.mrb[0].mxu0
        %v741 = vadd.f32 0.0, %v740
        %v742 = vpop.f32.mrb[0].mxu0
        %v743 = vpop.f32.mrb[0].mxu0
        %v744 = vadd.f32 0.0, %v743
        %v745 = vpop.f32.mrb[0].mxu0
        %746 = vmatprep.mubr.bf16.mxu0 %v615
        %747 = vmatmul.mubr.bf16.gmra.mrb[0].mxu0 %v614
        %v748 = vpop.f32.mrb[0].mxu0
        %v749 = vadd.f32 0.0, %v748
        %v750 = vpop.f32.mrb[0].mxu0
        %v751 = vpop.f32.mrb[0].mxu0
        %v752 = vadd.f32 0.0, %v751
        %v753 = vpop.f32.mrb[0].mxu0
        %754 = vmatprep.mubr.bf16.mxu0 %v617
        %755 = vmatmul.mubr.bf16.gmra.mrb[0].mxu0 %v616
        %v756 = vpop.f32.mrb[0].mxu0
        %v757 = vadd.f32 0.0, %v756
        %v758 = vpop.f32.mrb[0].mxu0
        %v759 = vpop.f32.mrb[0].mxu0
        %v760 = vadd.f32 0.0, %v759
        %v761 = vpop.f32.mrb[0].mxu0
        %762 = vmatprep.mubr.bf16.mxu0 %v619
        %763 = vmatmul.mubr.bf16.gmra.mrb[0].mxu0 %v618
        %v764 = vpop.f32.mrb[0].mxu0
        %v765 = vadd.f32 0.0, %v764
        %v766 = vpop.f32.mrb[0].mxu0
        %v767 = vpop.f32.mrb[0].mxu0
        %v768 = vadd.f32 0.0, %v767
        %v769 = vpop.f32.mrb[0].mxu0
        %770 = vmatprep.mubr.bf16.mxu0 %v621
        %771 = vmatmul.mubr.bf16.gmra.mrb[0].mxu0 %v620
        %v772 = vpop.f32.mrb[0].mxu0
        %v773 = vadd.f32 0.0, %v772
        %v774 = vpop.f32.mrb[0].mxu0
        %v775 = vpop.f32.mrb[0].mxu0
        %v776 = vadd.f32 0.0, %v775
        %v777 = vpop.f32.mrb[0].mxu0
        %778 = vmatprep.mubr.bf16.mxu0 %v623
        %779 = vmatmul.mubr.bf16.gmra.mrb[0].mxu0 %v622
        %v780 = vpop.f32.mrb[0].mxu0
        %v781 = vadd.f32 0.0, %v780
        %v782 = vpop.f32.mrb[0].mxu0
        %v783 = vpop.f32.mrb[0].mxu0
        %v784 = vadd.f32 0.0, %v783
        %v785 = vpop.f32.mrb[0].mxu0
        %786 = vmatprep.mubr.bf16.mxu0 %v625
        %787 = vmatmul.mubr.bf16.gmra.mrb[0].mxu0 %v624
        %v788 = vpop.f32.mrb[0].mxu0
        %v789 = vadd.f32 0.0, %v788
        %v790 = vpop.f32.mrb[0].mxu0
        %v791 = vpop.f32.mrb[0].mxu0
        %v792 = vadd.f32 0.0, %v791
        %v793 = vpop.f32.mrb[0].mxu0
        %794 = vmatprep.mubr.bf16.mxu0 %v627
        %795 = vmatmul.mubr.bf16.gmra.mrb[0].mxu0 %v626
        %v796 = vpop.f32.mrb[0].mxu0
        %v797 = vadd.f32 0.0, %v796
        %v798 = vpop.f32.mrb[0].mxu0
        %v799 = vpop.f32.mrb[0].mxu0
        %v800 = vadd.f32 0.0, %v799
        %v801 = vpop.f32.mrb[0].mxu0
        %802 = vmatprep.mubr.bf16.mxu0 %v629
        %803 = vmatmul.mubr.bf16.gmra.mrb[0].mxu0 %v628
        %v804 = vpop.f32.mrb[0].mxu0
        %v805 = vadd.f32 0.0, %v804
        %v806 = vpop.f32.mrb[0].mxu0
        %v807 = vpop.f32.mrb[0].mxu0
        %v808 = vadd.f32 0.0, %v807
        %v809 = vpop.f32.mrb[0].mxu0
        %810 = vmatprep.mubr.bf16.mxu0 %v631
        %811 = vmatmul.mubr.bf16.gmra.mrb[0].mxu0 %v630
        %v812 = vpop.f32.mrb[0].mxu0
        %v813 = vadd.f32 0.0, %v812
        %v814 = vpop.f32.mrb[0].mxu0
        %v815 = vpop.f32.mrb[0].mxu0
        %v816 = vadd.f32 0.0, %v815
        %v817 = vpop.f32.mrb[0].mxu0
        %818 = vmatprep.mubr.bf16.mxu0 %v633
        %819 = vmatmul.mubr.bf16.gmra.mrb[0].mxu0 %v632
        %v820 = vpop.f32.mrb[0].mxu0
        %v821 = vadd.f32 0.0, %v820
        %v822 = vpop.f32.mrb[0].mxu0
        %v823 = vpop.f32.mrb[0].mxu0
        %v824 = vadd.f32 0.0, %v823
        %v825 = vpop.f32.mrb[0].mxu0
        %826 = vdwg.mxu0
        %v827 = vadd.f32 %v394, %v701
        %v828 = vadd.f32 %v395, %v704
        %v829 = vadd.f32 %v396, %v709
        %v830 = vadd.f32 %v397, %v712
        %v831 = vadd.f32 %v398, %v717
        %v832 = vadd.f32 %v399, %v720
        %v833 = vadd.f32 %v400, %v725
        %v834 = vadd.f32 %v401, %v728
        %v835 = vadd.f32 %v402, %v733
        %v836 = vadd.f32 %v403, %v736
        %v837 = vadd.f32 %v404, %v741
        %v838 = vadd.f32 %v405, %v744
        %v839 = vadd.f32 %v406, %v749
        %v840 = vadd.f32 %v407, %v752
        %v841 = vadd.f32 %v408, %v757
        %v842 = vadd.f32 %v409, %v760
        %v843 = vadd.f32 %v410, %v765
        %v844 = vadd.f32 %v411, %v768
        %v845 = vadd.f32 %v412, %v773
        %v846 = vadd.f32 %v413, %v776
        %v847 = vadd.f32 %v414, %v781
        %v848 = vadd.f32 %v415, %v784
        %v849 = vadd.f32 %v416, %v789
        %v850 = vadd.f32 %v417, %v792
        %v851 = vadd.f32 %v418, %v797
        %v852 = vadd.f32 %v419, %v800
        %v853 = vadd.f32 %v420, %v805
        %v854 = vadd.f32 %v421, %v808
        %v855 = vadd.f32 %v422, %v813
        %v856 = vadd.f32 %v423, %v816
        %v857 = vadd.f32 %v424, %v821
        %v858 = vadd.f32 %v425, %v824
        %859 = vst [vmem:[#allocation2] sm:$0xff] %v827
        %860 = vst [vmem:[#allocation2 + $0x8] sm:$0xff] %v828
        %861 = vst [vmem:[#allocation2 + $0x10] sm:$0xff] %v829
        %862 = vst [vmem:[#allocation2 + $0x18] sm:$0xff] %v830
        %863 = vst [vmem:[#allocation2 + $0x20] sm:$0xff] %v831
        %864 = vst [vmem:[#allocation2 + $0x28] sm:$0xff] %v832
        %865 = vst [vmem:[#allocation2 + $0x30] sm:$0xff] %v833
        %866 = vst [vmem:[#allocation2 + $0x38] sm:$0xff] %v834
        %867 = vst [vmem:[#allocation2 + $0x40] sm:$0xff] %v835
        %868 = vst [vmem:[#allocation2 + $0x48] sm:$0xff] %v836
        %869 = vst [vmem:[#allocation2 + $0x50] sm:$0xff] %v837
        %870 = vst [vmem:[#allocation2 + $0x58] sm:$0xff] %v838
        %871 = vst [vmem:[#allocation2 + $0x60] sm:$0xff] %v839
        %872 = vst [vmem:[#allocation2 + $0x68] sm:$0xff] %v840
        %873 = vst [vmem:[#allocation2 + $0x70] sm:$0xff] %v841
        %874 = vst [vmem:[#allocation2 + $0x78] sm:$0xff] %v842
        %875 = vst [vmem:[#allocation2 + $0x80] sm:$0xff] %v843
        %876 = vst [vmem:[#allocation2 + $0x88] sm:$0xff] %v844
        %877 = vst [vmem:[#allocation2 + $0x90] sm:$0xff] %v845
        %878 = vst [vmem:[#allocation2 + $0x98] sm:$0xff] %v846
        %879 = vst [vmem:[#allocation2 + $0xa0] sm:$0xff] %v847
        %880 = vst [vmem:[#allocation2 + $0xa8] sm:$0xff] %v848
        %881 = vst [vmem:[#allocation2 + $0xb0] sm:$0xff] %v849
        %882 = vst [vmem:[#allocation2 + $0xb8] sm:$0xff] %v850
        %883 = vst [vmem:[#allocation2 + $0xc0] sm:$0xff] %v851
        %884 = vst [vmem:[#allocation2 + $0xc8] sm:$0xff] %v852
        %885 = vst [vmem:[#allocation2 + $0xd0] sm:$0xff] %v853
        %886 = vst [vmem:[#allocation2 + $0xd8] sm:$0xff] %v854
        %887 = vst [vmem:[#allocation2 + $0xe0] sm:$0xff] %v855
        %888 = vst [vmem:[#allocation2 + $0xe8] sm:$0xff] %v856
        %889 = vst [vmem:[#allocation2 + $0xf0] sm:$0xff] %v857
        %890 = vst [vmem:[#allocation2 + $0xf8] sm:$0xff] %v858
        %p891 = scmp.eq.s32.totalorder %s31, 1
        // Predicated region
        $region61: #{tpu_custom_call.1} parent=39 // pred_check
          %p892 = pneg %p891
        $region62: #{tpu_custom_call.1} parent=39 // pred_check_branch
          %894 = sbr.rel (%p892) target = $region64
        $region63: #{tpu_custom_call.1} parent=39 // pred_region
          %v895 = vld [vmem:[#allocation2] sm:$0xff]
          %v896 = vld [vmem:[#allocation2 + $0x8] sm:$0xff]
          %v897 = vld [vmem:[#allocation2 + $0x10] sm:$0xff]
          %v898 = vld [vmem:[#allocation2 + $0x18] sm:$0xff]
          %v899 = vld [vmem:[#allocation2 + $0x20] sm:$0xff]
          %v900 = vld [vmem:[#allocation2 + $0x28] sm:$0xff]
          %v901 = vld [vmem:[#allocation2 + $0x30] sm:$0xff]
          %v902 = vld [vmem:[#allocation2 + $0x38] sm:$0xff]
          %v903 = vld [vmem:[#allocation2 + $0x40] sm:$0xff]
          %v904 = vld [vmem:[#allocation2 + $0x48] sm:$0xff]
          %v905 = vld [vmem:[#allocation2 + $0x50] sm:$0xff]
          %v906 = vld [vmem:[#allocation2 + $0x58] sm:$0xff]
          %v907 = vld [vmem:[#allocation2 + $0x60] sm:$0xff]
          %v908 = vld [vmem:[#allocation2 + $0x68] sm:$0xff]
          %v909 = vld [vmem:[#allocation2 + $0x70] sm:$0xff]
          %v910 = vld [vmem:[#allocation2 + $0x78] sm:$0xff]
          %v911 = vld [vmem:[#allocation2 + $0x80] sm:$0xff]
          %v912 = vld [vmem:[#allocation2 + $0x88] sm:$0xff]
          %v913 = vld [vmem:[#allocation2 + $0x90] sm:$0xff]
          %v914 = vld [vmem:[#allocation2 + $0x98] sm:$0xff]
          %v915 = vld [vmem:[#allocation2 + $0xa0] sm:$0xff]
          %v916 = vld [vmem:[#allocation2 + $0xa8] sm:$0xff]
          %v917 = vld [vmem:[#allocation2 + $0xb0] sm:$0xff]
          %v918 = vld [vmem:[#allocation2 + $0xb8] sm:$0xff]
          %v919 = vld [vmem:[#allocation2 + $0xc0] sm:$0xff]
          %v920 = vld [vmem:[#allocation2 + $0xc8] sm:$0xff]
          %v921 = vld [vmem:[#allocation2 + $0xd0] sm:$0xff]
          %v922 = vld [vmem:[#allocation2 + $0xd8] sm:$0xff]
          %v923 = vld [vmem:[#allocation2 + $0xe0] sm:$0xff]
          %v924 = vld [vmem:[#allocation2 + $0xe8] sm:$0xff]
          %v925 = vld [vmem:[#allocation2 + $0xf0] sm:$0xff]
          %v926 = vld [vmem:[#allocation2 + $0xf8] sm:$0xff]
          %v927 = vpack.c.bf16 %v896, %v895
          %v928 = vpack.c.bf16 %v898, %v897
          %v929 = vpack.c.bf16 %v900, %v899
          %v930 = vpack.c.bf16 %v902, %v901
          %v931 = vpack.c.bf16 %v904, %v903
          %v932 = vpack.c.bf16 %v906, %v905
          %v933 = vpack.c.bf16 %v908, %v907
          %v934 = vpack.c.bf16 %v910, %v909
          %v935 = vpack.c.bf16 %v912, %v911
          %v936 = vpack.c.bf16 %v914, %v913
          %v937 = vpack.c.bf16 %v916, %v915
          %v938 = vpack.c.bf16 %v918, %v917
          %v939 = vpack.c.bf16 %v920, %v919
          %v940 = vpack.c.bf16 %v922, %v921
          %v941 = vpack.c.bf16 %v924, %v923
          %v942 = vpack.c.bf16 %v926, %v925
          %v943 = vld [vmem:[%s311] sm:$0xff]
          %v944 = vld [vmem:[%s311 + $0x8] sm:$0xff]
          %v945 = vld [vmem:[%s311 + $0x10] sm:$0xff]
          %v946 = vld [vmem:[%s311 + $0x18] sm:$0xff]
          %v947 = vld [vmem:[%s311 + $0x20] sm:$0xff]
          %v948 = vld [vmem:[%s311 + $0x28] sm:$0xff]
          %v949 = vld [vmem:[%s311 + $0x30] sm:$0xff]
          %v950 = vld [vmem:[%s311 + $0x38] sm:$0xff]
          %v951 = vld [vmem:[%s311 + $0x40] sm:$0xff]
          %v952 = vld [vmem:[%s311 + $0x48] sm:$0xff]
          %v953 = vld [vmem:[%s311 + $0x50] sm:$0xff]
          %v954 = vld [vmem:[%s311 + $0x58] sm:$0xff]
          %v955 = vld [vmem:[%s311 + $0x60] sm:$0xff]
          %v956 = vld [vmem:[%s311 + $0x68] sm:$0xff]
          %v957 = vld [vmem:[%s311 + $0x70] sm:$0xff]
          %v958 = vld [vmem:[%s311 + $0x78] sm:$0xff]
          %v959 = vld [vmem:[%s311 + $0x80] sm:$0xff]
          %v960 = vld [vmem:[%s311 + $0x88] sm:$0xff]
          %v961 = vld [vmem:[%s311 + $0x90] sm:$0xff]
          %v962 = vld [vmem:[%s311 + $0x98] sm:$0xff]
          %v963 = vld [vmem:[%s311 + $0xa0] sm:$0xff]
          %v964 = vld [vmem:[%s311 + $0xa8] sm:$0xff]
          %v965 = vld [vmem:[%s311 + $0xb0] sm:$0xff]
          %v966 = vld [vmem:[%s311 + $0xb8] sm:$0xff]
          %v967 = vld [vmem:[%s311 + $0xc0] sm:$0xff]
          %v968 = vld [vmem:[%s311 + $0xc8] sm:$0xff]
          %v969 = vld [vmem:[%s311 + $0xd0] sm:$0xff]
          %v970 = vld [vmem:[%s311 + $0xd8] sm:$0xff]
          %v971 = vld [vmem:[%s311 + $0xe0] sm:$0xff]
          %v972 = vld [vmem:[%s311 + $0xe8] sm:$0xff]
          %v973 = vld [vmem:[%s311 + $0xf0] sm:$0xff]
          %v974 = vld [vmem:[%s311 + $0xf8] sm:$0xff]
          %v975 = vpack.c.bf16 %v944, %v943
          %v976 = vpack.c.bf16 %v946, %v945
          %v977 = vpack.c.bf16 %v948, %v947
          %v978 = vpack.c.bf16 %v950, %v949
          %v979 = vpack.c.bf16 %v952, %v951
          %v980 = vpack.c.bf16 %v954, %v953
          %v981 = vpack.c.bf16 %v956, %v955
          %v982 = vpack.c.bf16 %v958, %v957
          %v983 = vpack.c.bf16 %v960, %v959
          %v984 = vpack.c.bf16 %v962, %v961
          %v985 = vpack.c.bf16 %v964, %v963
          %v986 = vpack.c.bf16 %v966, %v965
          %v987 = vpack.c.bf16 %v968, %v967
          %v988 = vpack.c.bf16 %v970, %v969
          %v989 = vpack.c.bf16 %v972, %v971
          %v990 = vpack.c.bf16 %v974, %v973
          %v991 = vld [vmem:[#allocation9] sm:$0xff]
          %v992 = vld [vmem:[#allocation9 + $0x8] sm:$0xff]
          %v993 = vld [vmem:[#allocation9 + $0x10] sm:$0xff]
          %v994 = vld [vmem:[#allocation9 + $0x18] sm:$0xff]
          %v995 = vld [vmem:[#allocation9 + $0x20] sm:$0xff]
          %v996 = vld [vmem:[#allocation9 + $0x28] sm:$0xff]
          %v997 = vld [vmem:[#allocation9 + $0x30] sm:$0xff]
          %v998 = vld [vmem:[#allocation9 + $0x38] sm:$0xff]
          %v999 = vld [vmem:[#allocation9 + $0x40] sm:$0xff]
          %v1000 = vld [vmem:[#allocation9 + $0x48] sm:$0xff]
          %v1001 = vld [vmem:[#allocation9 + $0x50] sm:$0xff]
          %v1002 = vld [vmem:[#allocation9 + $0x58] sm:$0xff]
          %v1003 = vld [vmem:[#allocation9 + $0x60] sm:$0xff]
          %v1004 = vld [vmem:[#allocation9 + $0x68] sm:$0xff]
          %v1005 = vld [vmem:[#allocation9 + $0x70] sm:$0xff]
          %v1006 = vld [vmem:[#allocation9 + $0x78] sm:$0xff]
          %v1007 = vld [vmem:[#allocation9 + $0x80] sm:$0xff]
          %v1008 = vld [vmem:[#allocation9 + $0x88] sm:$0xff]
          %v1009 = vld [vmem:[#allocation9 + $0x90] sm:$0xff]
          %v1010 = vld [vmem:[#allocation9 + $0x98] sm:$0xff]
          %v1011 = vld [vmem:[#allocation9 + $0xa0] sm:$0xff]
          %v1012 = vld [vmem:[#allocation9 + $0xa8] sm:$0xff]
          %v1013 = vld [vmem:[#allocation9 + $0xb0] sm:$0xff]
          %v1014 = vld [vmem:[#allocation9 + $0xb8] sm:$0xff]
          %v1015 = vld [vmem:[#allocation9 + $0xc0] sm:$0xff]
          %v1016 = vld [vmem:[#allocation9 + $0xc8] sm:$0xff]
          %v1017 = vld [vmem:[#allocation9 + $0xd0] sm:$0xff]
          %v1018 = vld [vmem:[#allocation9 + $0xd8] sm:$0xff]
          %v1019 = vld [vmem:[#allocation9 + $0xe0] sm:$0xff]
          %v1020 = vld [vmem:[#allocation9 + $0xe8] sm:$0xff]
          %v1021 = vld [vmem:[#allocation9 + $0xf0] sm:$0xff]
          %v1022 = vld [vmem:[#allocation9 + $0xf8] sm:$0xff]
          %v1023 = vld [vmem:[%s4] sm:$0x3]
          %v1025 = vlaneseq
          %v1026 = vshrl.u32 %v1025, 7
          %v1027 = vsub.s32 0, %v1026
          %v1028 = vrot.slane %v1023, %v1027
          %v1029 = vlaneseq
          %v1030 = vshrl.u32 %v1029, 7
          %v1031 = vsub.s32 1, %v1030
          %v1032 = vrot.slane %v1023, %v1031
          %v1067 = vunpack.c.l.b16 %v991
          %v1068 = vunpack.c.h.b16 %v991
          %v1069 = vunpack.c.l.b16 %v992
          %v1070 = vunpack.c.h.b16 %v992
          %v1071 = vunpack.c.l.b16 %v993
          %v1072 = vunpack.c.h.b16 %v993
          %v1073 = vunpack.c.l.b16 %v994
          %v1074 = vunpack.c.h.b16 %v994
          %v1075 = vunpack.c.l.b16 %v995
          %v1076 = vunpack.c.h.b16 %v995
          %v1077 = vunpack.c.l.b16 %v996
          %v1078 = vunpack.c.h.b16 %v996
          %v1079 = vunpack.c.l.b16 %v997
          %v1080 = vunpack.c.h.b16 %v997
          %v1081 = vunpack.c.l.b16 %v998
          %v1082 = vunpack.c.h.b16 %v998
          %v1083 = vunpack.c.l.b16 %v999
          %v1084 = vunpack.c.h.b16 %v999
          %v1085 = vunpack.c.l.b16 %v1000
          %v1086 = vunpack.c.h.b16 %v1000
          %v1087 = vunpack.c.l.b16 %v1001
          %v1088 = vunpack.c.h.b16 %v1001
          %v1089 = vunpack.c.l.b16 %v1002
          %v1090 = vunpack.c.h.b16 %v1002
          %v1091 = vunpack.c.l.b16 %v1003
          %v1092 = vunpack.c.h.b16 %v1003
          %v1093 = vunpack.c.l.b16 %v1004
          %v1094 = vunpack.c.h.b16 %v1004
          %v1095 = vunpack.c.l.b16 %v1005
          %v1096 = vunpack.c.h.b16 %v1005
          %v1097 = vunpack.c.l.b16 %v1006
          %v1098 = vunpack.c.h.b16 %v1006
          %v1099 = vunpack.c.l.b16 %v1007
          %v1100 = vunpack.c.h.b16 %v1007
          %v1101 = vunpack.c.l.b16 %v1008
          %v1102 = vunpack.c.h.b16 %v1008
          %v1103 = vunpack.c.l.b16 %v1009
          %v1104 = vunpack.c.h.b16 %v1009
          %v1105 = vunpack.c.l.b16 %v1010
          %v1106 = vunpack.c.h.b16 %v1010
          %v1107 = vunpack.c.l.b16 %v1011
          %v1108 = vunpack.c.h.b16 %v1011
          %v1109 = vunpack.c.l.b16 %v1012
          %v1110 = vunpack.c.h.b16 %v1012
          %v1111 = vunpack.c.l.b16 %v1013
          %v1112 = vunpack.c.h.b16 %v1013
          %v1113 = vunpack.c.l.b16 %v1014
          %v1114 = vunpack.c.h.b16 %v1014
          %v1115 = vunpack.c.l.b16 %v1015
          %v1116 = vunpack.c.h.b16 %v1015
          %v1117 = vunpack.c.l.b16 %v1016
          %v1118 = vunpack.c.h.b16 %v1016
          %v1119 = vunpack.c.l.b16 %v1017
          %v1120 = vunpack.c.h.b16 %v1017
          %v1121 = vunpack.c.l.b16 %v1018
          %v1122 = vunpack.c.h.b16 %v1018
          %v1123 = vunpack.c.l.b16 %v1019
          %v1124 = vunpack.c.h.b16 %v1019
          %v1125 = vunpack.c.l.b16 %v1020
          %v1126 = vunpack.c.h.b16 %v1020
          %v1127 = vunpack.c.l.b16 %v1021
          %v1128 = vunpack.c.h.b16 %v1021
          %v1129 = vunpack.c.l.b16 %v1022
          %v1130 = vunpack.c.h.b16 %v1022
          %v1131 = vpack.c.b16 %v1069, %v1067
          %v1132 = vpack.c.b16 %v1070, %v1068
          %v1133 = vpack.c.b16 %v1073, %v1071
          %v1134 = vpack.c.b16 %v1074, %v1072
          %v1135 = vpack.c.b16 %v1077, %v1075
          %v1136 = vpack.c.b16 %v1078, %v1076
          %v1137 = vpack.c.b16 %v1081, %v1079
          %v1138 = vpack.c.b16 %v1082, %v1080
          %v1139 = vpack.c.b16 %v1085, %v1083
          %v1140 = vpack.c.b16 %v1086, %v1084
          %v1141 = vpack.c.b16 %v1089, %v1087
          %v1142 = vpack.c.b16 %v1090, %v1088
          %v1143 = vpack.c.b16 %v1093, %v1091
          %v1144 = vpack.c.b16 %v1094, %v1092
          %v1145 = vpack.c.b16 %v1097, %v1095
          %v1146 = vpack.c.b16 %v1098, %v1096
          %v1147 = vpack.c.b16 %v1101, %v1099
          %v1148 = vpack.c.b16 %v1102, %v1100
          %v1149 = vpack.c.b16 %v1105, %v1103
          %v1150 = vpack.c.b16 %v1106, %v1104
          %v1151 = vpack.c.b16 %v1109, %v1107
          %v1152 = vpack.c.b16 %v1110, %v1108
          %v1153 = vpack.c.b16 %v1113, %v1111
          %v1154 = vpack.c.b16 %v1114, %v1112
          %v1155 = vpack.c.b16 %v1117, %v1115
          %v1156 = vpack.c.b16 %v1118, %v1116
          %v1157 = vpack.c.b16 %v1121, %v1119
          %v1158 = vpack.c.b16 %v1122, %v1120
          %v1159 = vpack.c.b16 %v1125, %v1123
          %v1160 = vpack.c.b16 %v1126, %v1124
          %v1161 = vpack.c.b16 %v1129, %v1127
          %v1162 = vpack.c.b16 %v1130, %v1128
          %1195 = vmatprep.subr.bf16.mxu0 %v1132
          %1196 = vmatpush1.bf16.msra.mxu0 %v1131
          %1197 = vmatprep.subr.bf16.mxu0 %v1134
          %1198 = vmatpush1.bf16.msra.mxu0 %v1133
          %1199 = vmatprep.subr.bf16.mxu0 %v1136
          %1200 = vmatpush1.bf16.msra.mxu0 %v1135
          %1201 = vmatprep.subr.bf16.mxu0 %v1138
          %1202 = vmatpush1.bf16.msra.mxu0 %v1137
          %1203 = vmatprep.subr.bf16.mxu0 %v1140
          %1204 = vmatpush1.bf16.msra.mxu0 %v1139
          %1205 = vmatprep.subr.bf16.mxu0 %v1142
          %1206 = vmatpush1.bf16.msra.mxu0 %v1141
          %1207 = vmatprep.subr.bf16.mxu0 %v1144
          %1208 = vmatpush1.bf16.msra.mxu0 %v1143
          %1209 = vmatprep.subr.bf16.mxu0 %v1146
          %1210 = vmatpush1.bf16.msra.mxu0 %v1145
          %1211 = vmatprep.subr.bf16.mxu0 %v1148
          %1212 = vmatpush1.bf16.msra.mxu0 %v1147
          %1213 = vmatprep.subr.bf16.mxu0 %v1150
          %1214 = vmatpush1.bf16.msra.mxu0 %v1149
          %1215 = vmatprep.subr.bf16.mxu0 %v1152
          %1216 = vmatpush1.bf16.msra.mxu0 %v1151
          %1217 = vmatprep.subr.bf16.mxu0 %v1154
          %1218 = vmatpush1.bf16.msra.mxu0 %v1153
          %1219 = vmatprep.subr.bf16.mxu0 %v1156
          %1220 = vmatpush1.bf16.msra.mxu0 %v1155
          %1221 = vmatprep.subr.bf16.mxu0 %v1158
          %1222 = vmatpush1.bf16.msra.mxu0 %v1157
          %1223 = vmatprep.subr.bf16.mxu0 %v1160
          %1224 = vmatpush1.bf16.msra.mxu0 %v1159
          %1225 = vmatprep.subr.bf16.mxu0 %v1162
          %1226 = vmatpush1.bf16.msra.mxu0 %v1161
          %1227 = vmatprep.mubr.bf16.mxu0 %v975
          %1228 = vmatmul.mubr.bf16.gmra.mrb[0].mxu0 %v927
          %v1229 = vpop.f32.mrb[0].mxu0
          %v1230 = vadd.f32 %v1028, %v1229
          %v1231 = vpop.f32.mrb[0].mxu0
          %v1232 = vadd.f32 %v1032, %v1231
          %v1233 = vpop.f32.mrb[0].mxu0
          %v1234 = vadd.f32 %v1028, %v1233
          %v1235 = vpop.f32.mrb[0].mxu0
          %v1236 = vadd.f32 %v1032, %v1235
          %1237 = vmatprep.mubr.bf16.mxu0 %v976
          %1238 = vmatmul.mubr.bf16.gmra.mrb[0].mxu0 %v928
          %v1239 = vpop.f32.mrb[0].mxu0
          %v1240 = vadd.f32 %v1028, %v1239
          %v1241 = vpop.f32.mrb[0].mxu0
          %v1242 = vadd.f32 %v1032, %v1241
          %v1243 = vpop.f32.mrb[0].mxu0
          %v1244 = vadd.f32 %v1028, %v1243
          %v1245 = vpop.f32.mrb[0].mxu0
          %v1246 = vadd.f32 %v1032, %v1245
          %1247 = vmatprep.mubr.bf16.mxu0 %v977
          %1248 = vmatmul.mubr.bf16.gmra.mrb[0].mxu0 %v929
          %v1249 = vpop.f32.mrb[0].mxu0
          %v1250 = vadd.f32 %v1028, %v1249
          %v1251 = vpop.f32.mrb[0].mxu0
          %v1252 = vadd.f32 %v1032, %v1251
          %v1253 = vpop.f32.mrb[0].mxu0
          %v1254 = vadd.f32 %v1028, %v1253
          %v1255 = vpop.f32.mrb[0].mxu0
          %v1256 = vadd.f32 %v1032, %v1255
          %1257 = vmatprep.mubr.bf16.mxu0 %v978
          %1258 = vmatmul.mubr.bf16.gmra.mrb[0].mxu0 %v930
          %v1259 = vpop.f32.mrb[0].mxu0
          %v1260 = vadd.f32 %v1028, %v1259
          %v1261 = vpop.f32.mrb[0].mxu0
          %v1262 = vadd.f32 %v1032, %v1261
          %v1263 = vpop.f32.mrb[0].mxu0
          %v1264 = vadd.f32 %v1028, %v1263
          %v1265 = vpop.f32.mrb[0].mxu0
          %v1266 = vadd.f32 %v1032, %v1265
          %1267 = vmatprep.mubr.bf16.mxu0 %v979
          %1268 = vmatmul.mubr.bf16.gmra.mrb[0].mxu0 %v931
          %v1269 = vpop.f32.mrb[0].mxu0
          %v1270 = vadd.f32 %v1028, %v1269
          %v1271 = vpop.f32.mrb[0].mxu0
          %v1272 = vadd.f32 %v1032, %v1271
          %v1273 = vpop.f32.mrb[0].mxu0
          %v1274 = vadd.f32 %v1028, %v1273
          %v1275 = vpop.f32.mrb[0].mxu0
          %v1276 = vadd.f32 %v1032, %v1275
          %1277 = vmatprep.mubr.bf16.mxu0 %v980
          %1278 = vmatmul.mubr.bf16.gmra.mrb[0].mxu0 %v932
          %v1279 = vpop.f32.mrb[0].mxu0
          %v1280 = vadd.f32 %v1028, %v1279
          %v1281 = vpop.f32.mrb[0].mxu0
          %v1282 = vadd.f32 %v1032, %v1281
          %v1283 = vpop.f32.mrb[0].mxu0
          %v1284 = vadd.f32 %v1028, %v1283
          %v1285 = vpop.f32.mrb[0].mxu0
          %v1286 = vadd.f32 %v1032, %v1285
          %1287 = vmatprep.mubr.bf16.mxu0 %v981
          %1288 = vmatmul.mubr.bf16.gmra.mrb[0].mxu0 %v933
          %v1289 = vpop.f32.mrb[0].mxu0
          %v1290 = vadd.f32 %v1028, %v1289
          %v1291 = vpop.f32.mrb[0].mxu0
          %v1292 = vadd.f32 %v1032, %v1291
          %v1293 = vpop.f32.mrb[0].mxu0
          %v1294 = vadd.f32 %v1028, %v1293
          %v1295 = vpop.f32.mrb[0].mxu0
          %v1296 = vadd.f32 %v1032, %v1295
          %1297 = vmatprep.mubr.bf16.mxu0 %v982
          %1298 = vmatmul.mubr.bf16.gmra.mrb[0].mxu0 %v934
          %v1299 = vpop.f32.mrb[0].mxu0
          %v1300 = vadd.f32 %v1028, %v1299
          %v1301 = vpop.f32.mrb[0].mxu0
          %v1302 = vadd.f32 %v1032, %v1301
          %v1303 = vpop.f32.mrb[0].mxu0
          %v1304 = vadd.f32 %v1028, %v1303
          %v1305 = vpop.f32.mrb[0].mxu0
          %v1306 = vadd.f32 %v1032, %v1305
          %1307 = vmatprep.mubr.bf16.mxu0 %v983
          %1308 = vmatmul.mubr.bf16.gmra.mrb[0].mxu0 %v935
          %v1309 = vpop.f32.mrb[0].mxu0
          %v1310 = vadd.f32 %v1028, %v1309
          %v1311 = vpop.f32.mrb[0].mxu0
          %v1312 = vadd.f32 %v1032, %v1311
          %v1313 = vpop.f32.mrb[0].mxu0
          %v1314 = vadd.f32 %v1028, %v1313
          %v1315 = vpop.f32.mrb[0].mxu0
          %v1316 = vadd.f32 %v1032, %v1315
          %1317 = vmatprep.mubr.bf16.mxu0 %v984
          %1318 = vmatmul.mubr.bf16.gmra.mrb[0].mxu0 %v936
          %v1319 = vpop.f32.mrb[0].mxu0
          %v1320 = vadd.f32 %v1028, %v1319
          %v1321 = vpop.f32.mrb[0].mxu0
          %v1322 = vadd.f32 %v1032, %v1321
          %v1323 = vpop.f32.mrb[0].mxu0
          %v1324 = vadd.f32 %v1028, %v1323
          %v1325 = vpop.f32.mrb[0].mxu0
          %v1326 = vadd.f32 %v1032, %v1325
          %1327 = vmatprep.mubr.bf16.mxu0 %v985
          %1328 = vmatmul.mubr.bf16.gmra.mrb[0].mxu0 %v937
          %v1329 = vpop.f32.mrb[0].mxu0
          %v1330 = vadd.f32 %v1028, %v1329
          %v1331 = vpop.f32.mrb[0].mxu0
          %v1332 = vadd.f32 %v1032, %v1331
          %v1333 = vpop.f32.mrb[0].mxu0
          %v1334 = vadd.f32 %v1028, %v1333
          %v1335 = vpop.f32.mrb[0].mxu0
          %v1336 = vadd.f32 %v1032, %v1335
          %1337 = vmatprep.mubr.bf16.mxu0 %v986
          %1338 = vmatmul.mubr.bf16.gmra.mrb[0].mxu0 %v938
          %v1339 = vpop.f32.mrb[0].mxu0
          %v1340 = vadd.f32 %v1028, %v1339
          %v1341 = vpop.f32.mrb[0].mxu0
          %v1342 = vadd.f32 %v1032, %v1341
          %v1343 = vpop.f32.mrb[0].mxu0
          %v1344 = vadd.f32 %v1028, %v1343
          %v1345 = vpop.f32.mrb[0].mxu0
          %v1346 = vadd.f32 %v1032, %v1345
          %1347 = vmatprep.mubr.bf16.mxu0 %v987
          %1348 = vmatmul.mubr.bf16.gmra.mrb[0].mxu0 %v939
          %v1349 = vpop.f32.mrb[0].mxu0
          %v1350 = vadd.f32 %v1028, %v1349
          %v1351 = vpop.f32.mrb[0].mxu0
          %v1352 = vadd.f32 %v1032, %v1351
          %v1353 = vpop.f32.mrb[0].mxu0
          %v1354 = vadd.f32 %v1028, %v1353
          %v1355 = vpop.f32.mrb[0].mxu0
          %v1356 = vadd.f32 %v1032, %v1355
          %1357 = vmatprep.mubr.bf16.mxu0 %v988
          %1358 = vmatmul.mubr.bf16.gmra.mrb[0].mxu0 %v940
          %v1359 = vpop.f32.mrb[0].mxu0
          %v1360 = vadd.f32 %v1028, %v1359
          %v1361 = vpop.f32.mrb[0].mxu0
          %v1362 = vadd.f32 %v1032, %v1361
          %v1363 = vpop.f32.mrb[0].mxu0
          %v1364 = vadd.f32 %v1028, %v1363
          %v1365 = vpop.f32.mrb[0].mxu0
          %v1366 = vadd.f32 %v1032, %v1365
          %1367 = vmatprep.mubr.bf16.mxu0 %v989
          %1368 = vmatmul.mubr.bf16.gmra.mrb[0].mxu0 %v941
          %v1369 = vpop.f32.mrb[0].mxu0
          %v1370 = vadd.f32 %v1028, %v1369
          %v1371 = vpop.f32.mrb[0].mxu0
          %v1372 = vadd.f32 %v1032, %v1371
          %v1373 = vpop.f32.mrb[0].mxu0
          %v1374 = vadd.f32 %v1028, %v1373
          %v1375 = vpop.f32.mrb[0].mxu0
          %v1376 = vadd.f32 %v1032, %v1375
          %1377 = vmatprep.mubr.bf16.mxu0 %v990
          %1378 = vmatmul.mubr.bf16.gmra.mrb[0].mxu0 %v942
          %v1379 = vpop.f32.mrb[0].mxu0
          %v1380 = vadd.f32 %v1028, %v1379
          %v1381 = vpop.f32.mrb[0].mxu0
          %v1382 = vadd.f32 %v1032, %v1381
          %v1383 = vpop.f32.mrb[0].mxu0
          %v1384 = vadd.f32 %v1028, %v1383
          %v1385 = vpop.f32.mrb[0].mxu0
          %v1386 = vadd.f32 %v1032, %v1385
          %1387 = vdwg.mxu0
          %vm1388 = vcmp.gt.f32.partialorder %v1230, 0.0
          %vm1389 = vcmp.gt.f32.partialorder %v1232, 0.0
          %vm1390 = vcmp.gt.f32.partialorder %v1234, 0.0
          %vm1391 = vcmp.gt.f32.partialorder %v1236, 0.0
          %vm1392 = vcmp.gt.f32.partialorder %v1240, 0.0
          %vm1393 = vcmp.gt.f32.partialorder %v1242, 0.0
          %vm1394 = vcmp.gt.f32.partialorder %v1244, 0.0
          %vm1395 = vcmp.gt.f32.partialorder %v1246, 0.0
          %vm1396 = vcmp.gt.f32.partialorder %v1250, 0.0
          %vm1397 = vcmp.gt.f32.partialorder %v1252, 0.0
          %vm1398 = vcmp.gt.f32.partialorder %v1254, 0.0
          %vm1399 = vcmp.gt.f32.partialorder %v1256, 0.0
          %vm1400 = vcmp.gt.f32.partialorder %v1260, 0.0
          %vm1401 = vcmp.gt.f32.partialorder %v1262, 0.0
          %vm1402 = vcmp.gt.f32.partialorder %v1264, 0.0
          %vm1403 = vcmp.gt.f32.partialorder %v1266, 0.0
          %vm1404 = vcmp.gt.f32.partialorder %v1270, 0.0
          %vm1405 = vcmp.gt.f32.partialorder %v1272, 0.0
          %vm1406 = vcmp.gt.f32.partialorder %v1274, 0.0
          %vm1407 = vcmp.gt.f32.partialorder %v1276, 0.0
          %vm1408 = vcmp.gt.f32.partialorder %v1280, 0.0
          %vm1409 = vcmp.gt.f32.partialorder %v1282, 0.0
          %vm1410 = vcmp.gt.f32.partialorder %v1284, 0.0
          %vm1411 = vcmp.gt.f32.partialorder %v1286, 0.0
          %vm1412 = vcmp.gt.f32.partialorder %v1290, 0.0
          %vm1413 = vcmp.gt.f32.partialorder %v1292, 0.0
          %vm1414 = vcmp.gt.f32.partialorder %v1294, 0.0
          %vm1415 = vcmp.gt.f32.partialorder %v1296, 0.0
          %vm1416 = vcmp.gt.f32.partialorder %v1300, 0.0
          %vm1417 = vcmp.gt.f32.partialorder %v1302, 0.0
          %vm1418 = vcmp.gt.f32.partialorder %v1304, 0.0
          %vm1419 = vcmp.gt.f32.partialorder %v1306, 0.0
          %vm1420 = vcmp.gt.f32.partialorder %v1310, 0.0
          %vm1421 = vcmp.gt.f32.partialorder %v1312, 0.0
          %vm1422 = vcmp.gt.f32.partialorder %v1314, 0.0
          %vm1423 = vcmp.gt.f32.partialorder %v1316, 0.0
          %vm1424 = vcmp.gt.f32.partialorder %v1320, 0.0
          %vm1425 = vcmp.gt.f32.partialorder %v1322, 0.0
          %vm1426 = vcmp.gt.f32.partialorder %v1324, 0.0
          %vm1427 = vcmp.gt.f32.partialorder %v1326, 0.0
          %vm1428 = vcmp.gt.f32.partialorder %v1330, 0.0
          %vm1429 = vcmp.gt.f32.partialorder %v1332, 0.0
          %vm1430 = vcmp.gt.f32.partialorder %v1334, 0.0
          %vm1431 = vcmp.gt.f32.partialorder %v1336, 0.0
          %vm1432 = vcmp.gt.f32.partialorder %v1340, 0.0
          %vm1433 = vcmp.gt.f32.partialorder %v1342, 0.0
          %vm1434 = vcmp.gt.f32.partialorder %v1344, 0.0
          %vm1435 = vcmp.gt.f32.partialorder %v1346, 0.0
          %vm1436 = vcmp.gt.f32.partialorder %v1350, 0.0
          %vm1437 = vcmp.gt.f32.partialorder %v1352, 0.0
          %vm1438 = vcmp.gt.f32.partialorder %v1354, 0.0
          %vm1439 = vcmp.gt.f32.partialorder %v1356, 0.0
          %vm1440 = vcmp.gt.f32.partialorder %v1360, 0.0
          %vm1441 = vcmp.gt.f32.partialorder %v1362, 0.0
          %vm1442 = vcmp.gt.f32.partialorder %v1364, 0.0
          %vm1443 = vcmp.gt.f32.partialorder %v1366, 0.0
          %vm1444 = vcmp.gt.f32.partialorder %v1370, 0.0
          %vm1445 = vcmp.gt.f32.partialorder %v1372, 0.0
          %vm1446 = vcmp.gt.f32.partialorder %v1374, 0.0
          %vm1447 = vcmp.gt.f32.partialorder %v1376, 0.0
          %vm1448 = vcmp.gt.f32.partialorder %v1380, 0.0
          %vm1449 = vcmp.gt.f32.partialorder %v1382, 0.0
          %vm1450 = vcmp.gt.f32.partialorder %v1384, 0.0
          %vm1451 = vcmp.gt.f32.partialorder %v1386, 0.0
          %v1452 = vmul.f32 %v1230, 0.01
          %v1453 = vmul.f32 %v1232, 0.01
          %v1454 = vmul.f32 %v1234, 0.01
          %v1455 = vmul.f32 %v1236, 0.01
          %v1456 = vmul.f32 %v1240, 0.01
          %v1457 = vmul.f32 %v1242, 0.01
          %v1458 = vmul.f32 %v1244, 0.01
          %v1459 = vmul.f32 %v1246, 0.01
          %v1460 = vmul.f32 %v1250, 0.01
          %v1461 = vmul.f32 %v1252, 0.01
          %v1462 = vmul.f32 %v1254, 0.01
          %v1463 = vmul.f32 %v1256, 0.01
          %v1464 = vmul.f32 %v1260, 0.01
          %v1465 = vmul.f32 %v1262, 0.01
          %v1466 = vmul.f32 %v1264, 0.01
          %v1467 = vmul.f32 %v1266, 0.01
          %v1468 = vmul.f32 %v1270, 0.01
          %v1469 = vmul.f32 %v1272, 0.01
          %v1470 = vmul.f32 %v1274, 0.01
          %v1471 = vmul.f32 %v1276, 0.01
          %v1472 = vmul.f32 %v1280, 0.01
          %v1473 = vmul.f32 %v1282, 0.01
          %v1474 = vmul.f32 %v1284, 0.01
          %v1475 = vmul.f32 %v1286, 0.01
          %v1476 = vmul.f32 %v1290, 0.01
          %v1477 = vmul.f32 %v1292, 0.01
          %v1478 = vmul.f32 %v1294, 0.01
          %v1479 = vmul.f32 %v1296, 0.01
          %v1480 = vmul.f32 %v1300, 0.01
          %v1481 = vmul.f32 %v1302, 0.01
          %v1482 = vmul.f32 %v1304, 0.01
          %v1483 = vmul.f32 %v1306, 0.01
          %v1484 = vmul.f32 %v1310, 0.01
          %v1485 = vmul.f32 %v1312, 0.01
          %v1486 = vmul.f32 %v1314, 0.01
          %v1487 = vmul.f32 %v1316, 0.01
          %v1488 = vmul.f32 %v1320, 0.01
          %v1489 = vmul.f32 %v1322, 0.01
          %v1490 = vmul.f32 %v1324, 0.01
          %v1491 = vmul.f32 %v1326, 0.01
          %v1492 = vmul.f32 %v1330, 0.01
          %v1493 = vmul.f32 %v1332, 0.01
          %v1494 = vmul.f32 %v1334, 0.01
          %v1495 = vmul.f32 %v1336, 0.01
          %v1496 = vmul.f32 %v1340, 0.01
          %v1497 = vmul.f32 %v1342, 0.01
          %v1498 = vmul.f32 %v1344, 0.01
          %v1499 = vmul.f32 %v1346, 0.01
          %v1500 = vmul.f32 %v1350, 0.01
          %v1501 = vmul.f32 %v1352, 0.01
          %v1502 = vmul.f32 %v1354, 0.01
          %v1503 = vmul.f32 %v1356, 0.01
          %v1504 = vmul.f32 %v1360, 0.01
          %v1505 = vmul.f32 %v1362, 0.01
          %v1506 = vmul.f32 %v1364, 0.01
          %v1507 = vmul.f32 %v1366, 0.01
          %v1508 = vmul.f32 %v1370, 0.01
          %v1509 = vmul.f32 %v1372, 0.01
          %v1510 = vmul.f32 %v1374, 0.01
          %v1511 = vmul.f32 %v1376, 0.01
          %v1512 = vmul.f32 %v1380, 0.01
          %v1513 = vmul.f32 %v1382, 0.01
          %v1514 = vmul.f32 %v1384, 0.01
          %v1515 = vmul.f32 %v1386, 0.01
          %v1516 = vsel %vm1388, %v1230, %v1452
          %v1517 = vsel %vm1389, %v1232, %v1453
          %v1518 = vsel %vm1390, %v1234, %v1454
          %v1519 = vsel %vm1391, %v1236, %v1455
          %v1520 = vsel %vm1392, %v1240, %v1456
          %v1521 = vsel %vm1393, %v1242, %v1457
          %v1522 = vsel %vm1394, %v1244, %v1458
          %v1523 = vsel %vm1395, %v1246, %v1459
          %v1524 = vsel %vm1396, %v1250, %v1460
          %v1525 = vsel %vm1397, %v1252, %v1461
          %v1526 = vsel %vm1398, %v1254, %v1462
          %v1527 = vsel %vm1399, %v1256, %v1463
          %v1528 = vsel %vm1400, %v1260, %v1464
          %v1529 = vsel %vm1401, %v1262, %v1465
          %v1530 = vsel %vm1402, %v1264, %v1466
          %v1531 = vsel %vm1403, %v1266, %v1467
          %v1532 = vsel %vm1404, %v1270, %v1468
          %v1533 = vsel %vm1405, %v1272, %v1469
          %v1534 = vsel %vm1406, %v1274, %v1470
          %v1535 = vsel %vm1407, %v1276, %v1471
          %v1536 = vsel %vm1408, %v1280, %v1472
          %v1537 = vsel %vm1409, %v1282, %v1473
          %v1538 = vsel %vm1410, %v1284, %v1474
          %v1539 = vsel %vm1411, %v1286, %v1475
          %v1540 = vsel %vm1412, %v1290, %v1476
          %v1541 = vsel %vm1413, %v1292, %v1477
          %v1542 = vsel %vm1414, %v1294, %v1478
          %v1543 = vsel %vm1415, %v1296, %v1479
          %v1544 = vsel %vm1416, %v1300, %v1480
          %v1545 = vsel %vm1417, %v1302, %v1481
          %v1546 = vsel %vm1418, %v1304, %v1482
          %v1547 = vsel %vm1419, %v1306, %v1483
          %v1548 = vsel %vm1420, %v1310, %v1484
          %v1549 = vsel %vm1421, %v1312, %v1485
          %v1550 = vsel %vm1422, %v1314, %v1486
          %v1551 = vsel %vm1423, %v1316, %v1487
          %v1552 = vsel %vm1424, %v1320, %v1488
          %v1553 = vsel %vm1425, %v1322, %v1489
          %v1554 = vsel %vm1426, %v1324, %v1490
          %v1555 = vsel %vm1427, %v1326, %v1491
          %v1556 = vsel %vm1428, %v1330, %v1492
          %v1557 = vsel %vm1429, %v1332, %v1493
          %v1558 = vsel %vm1430, %v1334, %v1494
          %v1559 = vsel %vm1431, %v1336, %v1495
          %v1560 = vsel %vm1432, %v1340, %v1496
          %v1561 = vsel %vm1433, %v1342, %v1497
          %v1562 = vsel %vm1434, %v1344, %v1498
          %v1563 = vsel %vm1435, %v1346, %v1499
          %v1564 = vsel %vm1436, %v1350, %v1500
          %v1565 = vsel %vm1437, %v1352, %v1501
          %v1566 = vsel %vm1438, %v1354, %v1502
          %v1567 = vsel %vm1439, %v1356, %v1503
          %v1568 = vsel %vm1440, %v1360, %v1504
          %v1569 = vsel %vm1441, %v1362, %v1505
          %v1570 = vsel %vm1442, %v1364, %v1506
          %v1571 = vsel %vm1443, %v1366, %v1507
          %v1572 = vsel %vm1444, %v1370, %v1508
          %v1573 = vsel %vm1445, %v1372, %v1509
          %v1574 = vsel %vm1446, %v1374, %v1510
          %v1575 = vsel %vm1447, %v1376, %v1511
          %v1576 = vsel %vm1448, %v1380, %v1512
          %v1577 = vsel %vm1449, %v1382, %v1513
          %v1578 = vsel %vm1450, %v1384, %v1514
          %v1579 = vsel %vm1451, %v1386, %v1515
          %1580 = vst [vmem:[%s351] sm:$0xff] %v1516
          %1581 = vst [vmem:[%s351 + $0x8] sm:$0xff] %v1517
          %1582 = vst [vmem:[%s351 + $0x10] sm:$0xff] %v1518
          %1583 = vst [vmem:[%s351 + $0x18] sm:$0xff] %v1519
          %1584 = vst [vmem:[%s351 + $0x20] sm:$0xff] %v1520
          %1585 = vst [vmem:[%s351 + $0x28] sm:$0xff] %v1521
          %1586 = vst [vmem:[%s351 + $0x30] sm:$0xff] %v1522
          %1587 = vst [vmem:[%s351 + $0x38] sm:$0xff] %v1523
          %1588 = vst [vmem:[%s351 + $0x40] sm:$0xff] %v1524
          %1589 = vst [vmem:[%s351 + $0x48] sm:$0xff] %v1525
          %1590 = vst [vmem:[%s351 + $0x50] sm:$0xff] %v1526
          %1591 = vst [vmem:[%s351 + $0x58] sm:$0xff] %v1527
          %1592 = vst [vmem:[%s351 + $0x60] sm:$0xff] %v1528
          %1593 = vst [vmem:[%s351 + $0x68] sm:$0xff] %v1529
          %1594 = vst [vmem:[%s351 + $0x70] sm:$0xff] %v1530
          %1595 = vst [vmem:[%s351 + $0x78] sm:$0xff] %v1531
          %1596 = vst [vmem:[%s351 + $0x80] sm:$0xff] %v1532
          %1597 = vst [vmem:[%s351 + $0x88] sm:$0xff] %v1533
          %1598 = vst [vmem:[%s351 + $0x90] sm:$0xff] %v1534
          %1599 = vst [vmem:[%s351 + $0x98] sm:$0xff] %v1535
          %1600 = vst [vmem:[%s351 + $0xa0] sm:$0xff] %v1536
          %1601 = vst [vmem:[%s351 + $0xa8] sm:$0xff] %v1537
          %1602 = vst [vmem:[%s351 + $0xb0] sm:$0xff] %v1538
          %1603 = vst [vmem:[%s351 + $0xb8] sm:$0xff] %v1539
          %1604 = vst [vmem:[%s351 + $0xc0] sm:$0xff] %v1540
          %1605 = vst [vmem:[%s351 + $0xc8] sm:$0xff] %v1541
          %1606 = vst [vmem:[%s351 + $0xd0] sm:$0xff] %v1542
          %1607 = vst [vmem:[%s351 + $0xd8] sm:$0xff] %v1543
          %1608 = vst [vmem:[%s351 + $0xe0] sm:$0xff] %v1544
          %1609 = vst [vmem:[%s351 + $0xe8] sm:$0xff] %v1545
          %1610 = vst [vmem:[%s351 + $0xf0] sm:$0xff] %v1546
          %1611 = vst [vmem:[%s351 + $0xf8] sm:$0xff] %v1547
          %1612 = vst [vmem:[%s351 + $0x100] sm:$0xff] %v1548
          %1613 = vst [vmem:[%s351 + $0x108] sm:$0xff] %v1549
          %1614 = vst [vmem:[%s351 + $0x110] sm:$0xff] %v1550
          %1615 = vst [vmem:[%s351 + $0x118] sm:$0xff] %v1551
          %1616 = vst [vmem:[%s351 + $0x120] sm:$0xff] %v1552
          %1617 = vst [vmem:[%s351 + $0x128] sm:$0xff] %v1553
          %1618 = vst [vmem:[%s351 + $0x130] sm:$0xff] %v1554
          %1619 = vst [vmem:[%s351 + $0x138] sm:$0xff] %v1555
          %1620 = vst [vmem:[%s351 + $0x140] sm:$0xff] %v1556
          %1621 = vst [vmem:[%s351 + $0x148] sm:$0xff] %v1557
          %1622 = vst [vmem:[%s351 + $0x150] sm:$0xff] %v1558
          %1623 = vst [vmem:[%s351 + $0x158] sm:$0xff] %v1559
          %1624 = vst [vmem:[%s351 + $0x160] sm:$0xff] %v1560
          %1625 = vst [vmem:[%s351 + $0x168] sm:$0xff] %v1561
          %1626 = vst [vmem:[%s351 + $0x170] sm:$0xff] %v1562
          %1627 = vst [vmem:[%s351 + $0x178] sm:$0xff] %v1563
          %1628 = vst [vmem:[%s351 + $0x180] sm:$0xff] %v1564
          %1629 = vst [vmem:[%s351 + $0x188] sm:$0xff] %v1565
          %1630 = vst [vmem:[%s351 + $0x190] sm:$0xff] %v1566
          %1631 = vst [vmem:[%s351 + $0x198] sm:$0xff] %v1567
          %1632 = vst [vmem:[%s351 + $0x1a0] sm:$0xff] %v1568
          %1633 = vst [vmem:[%s351 + $0x1a8] sm:$0xff] %v1569
          %1634 = vst [vmem:[%s351 + $0x1b0] sm:$0xff] %v1570
          %1635 = vst [vmem:[%s351 + $0x1b8] sm:$0xff] %v1571
          %1636 = vst [vmem:[%s351 + $0x1c0] sm:$0xff] %v1572
          %1637 = vst [vmem:[%s351 + $0x1c8] sm:$0xff] %v1573
          %1638 = vst [vmem:[%s351 + $0x1d0] sm:$0xff] %v1574
          %1639 = vst [vmem:[%s351 + $0x1d8] sm:$0xff] %v1575
          %1640 = vst [vmem:[%s351 + $0x1e0] sm:$0xff] %v1576
          %1641 = vst [vmem:[%s351 + $0x1e8] sm:$0xff] %v1577
          %1642 = vst [vmem:[%s351 + $0x1f0] sm:$0xff] %v1578
          %1643 = vst [vmem:[%s351 + $0x1f8] sm:$0xff] %v1579
        $region64: #{tpu_custom_call.1} parent=39 // pred_fallthru
          _
        %s1644 = sand.u32 %s168, 1
        %s1645 = scalar_lea.sflag [#allocation5], %s1644
        %s1646 = sand.u32 %s168, 1
        %s1647 = smul.addr %s1646, 512
        %s1648 = scalar_lea.vmem [#allocation11], %s1647
        // Predicated region
        $region65: #{tpu_custom_call.1} parent=39 // pred_check
          %p1649 = pneg %p178
        $region66: #{tpu_custom_call.1} parent=39 // pred_check_branch
          %1651 = sbr.rel (%p1649) target = $region68
        $region67: #{tpu_custom_call.1} parent=39 // pred_region
          %s1652 = smul.u32 32, %s30
          %s1654 = ssub.s32 8192, 8192
          %1655 = vsyncadd %s1645, %s1654
          %s1656 = smul.addr %s1652, 2
          %s1657 = smul.addr %s1656, 128
          %s1658 = scalar_lea.hbm %s5, %s1657
          %s1659 = sshll.u32 %s1648, 4
          %s1660 = int_to_ptr.vmem [resolvable:$true] %s1659
          %1665 = dma.vmem_to_hbm [thread:$0]  %s1660, 8192, %s1658, %s1645, 256, 256, 16
        $region68: #{tpu_custom_call.1} parent=39 // pred_fallthru
          _
      $region40: #{tpu_custom_call.1} parent=5 // pred_fallthru
        _
      %p1666 = scmp.le.s32.totalorder 2, %s21
      // Predicated region
      $region69: #{tpu_custom_call.1} parent=5 // pred_check
        %p1667 = pneg %p1666
      $region70: #{tpu_custom_call.1} parent=5 // pred_check_branch
        %1669 = sbr.rel (%p1667) target = $region72
      $region71: #{tpu_custom_call.1} parent=5 // pred_region
        %s1670 = ssub.s32 %s21, 2
        // Predicated region
        $region73: #{tpu_custom_call.1} parent=71 // pred_check
          %p1671 = pneg %p184
        $region74: #{tpu_custom_call.1} parent=71 // pred_check_branch
          %1673 = sbr.rel (%p1671) target = $region76
        $region75: #{tpu_custom_call.1} parent=71 // pred_region
          %s1674 = sand.u32 %s169, 1
          %s1675 = scalar_lea.sflag [#allocation5], %s1674
          %s1676 = sand.u32 %s169, 1
          %s1677 = smul.addr %s1676, 512
          %s1678 = scalar_lea.vmem [#allocation11], %s1677
          %1679 = dma.done %s1675, 8192
        $region76: #{tpu_custom_call.1} parent=71 // pred_fallthru
          _
      $region72: #{tpu_custom_call.1} parent=5 // pred_fallthru
        _
    $region6: #{tpu_custom_call.1} parent=1 // loop_footer
      %s25 = sadd.s32 1, %s21
    $region7: #{tpu_custom_call.1} parent=1 // loop_footer_branch
      %20 = sbr.rel target = $region3
    $region8: #{tpu_custom_call.1} parent=1 // loop_exit
      _
    %1680 = vsyncpa [#allocation4], 1
    %s1681 = scalar_lea.sflag [#allocation4], 1
    %1682 = vsyncpa %s1681, 1
    %1683 = vsyncpa [#allocation7], 1
    %s1684 = scalar_lea.sflag [#allocation7], 1
    %1685 = vsyncpa %s1684, 1
    %1686 = vsyncpa [#allocation10], 1
    %1687 = vsyncpa [#allocation5], 1
    %s1688 = scalar_lea.sflag [#allocation5], 1
    %1689 = vsyncpa %s1688, 1

</llo_original>
